<compile_context>
chip_gen: v7x
topology: tpu7x:2x2x1
jax: 0.10.0
libtpu: 0.0.40
codegen_flags: <defaults>
</compile_context>

<pallas_src>
import functools

import jax
import jax.numpy as jnp
from jax import lax
from jax.experimental import pallas as pl
from jax.experimental.pallas import tpu as pltpu

_NEG = -1e30  # large-but-finite "minus infinity" for padded tag lanes


def _round_up(x, m):
    return ((x + m - 1) // m) * m


def _crf_denominator_kernel(lengths_ref, logits_ref, exp_trans_ref, start_ref,
                            end_ref, out_ref, alpha_ref, *, num_tags):
    """Forward-algorithm recursion (log-denominator), one (b tile, t block).

    Grid = (b_tiles [parallel], t_blocks [arbitrary]).
    Blocks: lengths (tb, 1) i32 (constant along T);
            logits (tt, tb, n_pad) f32 (streamed, double-buffered);
            exp_trans (n_pad, n_pad) f32, pads = 0;
            start/end (1, n_pad) f32, pads = -1e30;
            out (tb, 1) f32.
    Scratch: alpha (tb, n_pad) f32 -- carried across the T-block axis.
    """
    t_blk = pl.program_id(1)
    last_t = pl.num_programs(1) - 1
    tt, tb, n_pad = logits_ref.shape

    exp_trans = exp_trans_ref[...]              # (n_pad, n_pad), pads = 0
    start_t = start_ref[...]                    # (1, n_pad), pads = -1e30
    end_t = end_ref[...]                        # (1, n_pad), pads = -1e30
    lengths = lengths_ref[...]                  # (tb, 1) int32; 0 for padded rows

    lane_valid = lax.broadcasted_iota(jnp.int32, (1, n_pad), 1) < num_tags
    neg = jnp.float32(_NEG)

    @pl.when(t_blk == 0)
    def _init():
        # alpha_0 = start + logits[0]   (pads stay at ~-1e30 via padded start)
        alpha_ref[...] = start_t + logits_ref[0]

    t_base = t_blk * tt

    def step(i, alpha):
        emit = logits_ref[i]                                   # (tb, n_pad)
        m = jnp.max(alpha, axis=1, keepdims=True)              # (tb, 1)
        p = jnp.exp(alpha - m)                                 # padded lanes -> 0
        s = lax.dot_general(p, exp_trans,                      # MXU
                            dimension_numbers=(((1,), (0,)), ((), ())),
                            preferred_element_type=jnp.float32)
        cand = emit + m + jnp.log(jnp.maximum(s, jnp.float32(1e-37)))
        cand = jnp.where(lane_valid, cand, neg)                # keep pad lanes inert
        g = t_base + i                                         # global time index
        # mask[g] derived from the prefix length; g == 0 was consumed by init
        mi = jnp.where(jnp.logical_and(g >= 1, g < lengths), 1.0, 0.0)  # (tb, 1)
        return cand * mi + alpha * (1.0 - mi)

    alpha_ref[...] = lax.fori_loop(0, tt, step, alpha_ref[...],
                                   unroll=max(1, min(8, tt)))

    @pl.when(t_blk == last_t)
    def _final():
        stops = alpha_ref[...] + end_t                         # pads ~ -2e30
        m = jnp.max(stops, axis=1, keepdims=True)
        out_ref[...] = m + jnp.log(jnp.sum(jnp.exp(stops - m), axis=1,
                                           keepdims=True))


def _pick_tiles(B, T, n_pad):
    """Tile heuristics: large batch tile, logits block <= ~2 MiB, and >= 2
    programs on the parallel batch axis when B allows (v7x megacore)."""
    tb = min(_round_up(B, 8), 256)
    b_pad = _round_up(B, tb)
    if b_pad // tb < 2 and B >= 16:
        tb = _round_up((b_pad + 1) // 2, 8)
        b_pad = _round_up(B, tb)
    block_budget = 2 * 1024 * 1024            # bytes per streamed logits block
    max_tt = max(8, block_budget // (tb * n_pad * 4))
    tt = min(T, max_tt)
    t_pad = _round_up(T, tt)
    return tb, b_pad, tt, t_pad


def _vmem_limit_bytes():
    cap = 64 * 1024 * 1024
    try:
        cap = int(pltpu.get_tpu_info().vmem_capacity_bytes)
    except Exception:
        pass
    # ~96 MiB on 128-MiB parts (v5e/v6e), ~48 MiB on 64-MiB parts (v7x).
    return min(cap * 3 // 4, 100 * 1024 * 1024)


def crf_log_likelihood(logits, tags, mask, transitions, start_transitions,
                       end_transitions, *, batch_tile=None, time_block=None):
    """Pallas-backed equivalent of ConditionalRandomField.forward
    (sum over batch of per-sequence log-likelihoods)."""
    B, T, N = logits.shape
    f32, i32 = jnp.float32, jnp.int32

    logits = logits.astype(f32)
    tags = tags.astype(i32)
    maskf = mask.astype(f32)
    transitions = transitions.astype(f32)
    start_transitions = start_transitions.astype(f32)
    end_transitions = end_transitions.astype(f32)

    # ---------------- numerator (gold-path score): plain XLA ----------------
    # Exact transcription of _joint_likelihood (gathers + reductions).
    emit_all = jnp.take_along_axis(logits, tags[..., None], axis=2)[..., 0]    # (B, T)
    emit_score = jnp.sum(emit_all[:, :-1] * maskf[:, :-1], axis=1)
    trans_score = jnp.sum(transitions[tags[:, :-1], tags[:, 1:]] * maskf[:, 1:],
                          axis=1)
    lengths = jnp.sum(mask.astype(i32), axis=1)                                # (B,)
    last_idx = jnp.maximum(lengths - 1, 0)
    last_tags = jnp.take_along_axis(tags, last_idx[:, None], axis=1)[:, 0]
    last_emit = jnp.take_along_axis(logits[:, -1, :], last_tags[:, None],
                                    axis=1)[:, 0]
    numerator = (start_transitions[tags[:, 0]] + emit_score + trans_score
                 + end_transitions[last_tags] + last_emit * maskf[:, -1])

    # ------------- denominator: Pallas forward-algorithm kernel -------------
    n_pad = _round_up(N, 128)                 # lane-pad the tag axis
    tb, b_pad, tt, t_pad = _pick_tiles(B, T, n_pad)
    if batch_tile is not None:
        tb = batch_tile
        b_pad = _round_up(B, tb)
    if time_block is not None:
        tt = time_block
        t_pad = _round_up(T, tt)

    # time-leading, padded logits (host-side, cheap)
    logits_t = jnp.transpose(logits, (1, 0, 2))                                # (T, B, N)
    logits_p = jnp.zeros((t_pad, b_pad, n_pad), f32).at[:T, :B, :N].set(logits_t)
    # per-row prefix length; 0 for padded batch rows (keeps them inert)
    lengths_p = jnp.zeros((b_pad, 1), i32).at[:B, 0].set(lengths)
    # exp(transitions) precomputed once; padded rows/cols = 0
    exp_trans_p = jnp.zeros((n_pad, n_pad), f32).at[:N, :N].set(jnp.exp(transitions))
    start_p = jnp.full((1, n_pad), _NEG, f32).at[0, :N].set(start_transitions)
    end_p = jnp.full((1, n_pad), _NEG, f32).at[0, :N].set(end_transitions)

    grid = (b_pad // tb, t_pad // tt)

    logden = pl.pallas_call(
        functools.partial(_crf_denominator_kernel, num_tags=N),
        out_shape=jax.ShapeDtypeStruct((b_pad, 1), jnp.float32),
        grid_spec=pltpu.PrefetchScalarGridSpec(
            num_scalar_prefetch=0,
            grid=grid,
            in_specs=[
                pl.BlockSpec((tb, 1), lambda b, t: (b, 0)),             # lengths
                pl.BlockSpec((tt, tb, n_pad), lambda b, t: (t, b, 0)),  # logits
                pl.BlockSpec((n_pad, n_pad), lambda b, t: (0, 0)),      # exp(trans)
                pl.BlockSpec((1, n_pad), lambda b, t: (0, 0)),          # start
                pl.BlockSpec((1, n_pad), lambda b, t: (0, 0)),          # end
            ],
            out_specs=pl.BlockSpec((tb, 1), lambda b, t: (b, 0)),
            scratch_shapes=[pltpu.VMEM((tb, n_pad), jnp.float32)],      # alpha carry
        ),
        compiler_params=pltpu.CompilerParams(
            dimension_semantics=("parallel", "arbitrary"),
            vmem_limit_bytes=_vmem_limit_bytes()),
    )(lengths_p, logits_p, exp_trans_p, start_p, end_p)

    # padded batch rows dropped here; final reduction in the wrapper
    return jnp.sum(numerator - logden[:B, 0])


# ----------------------------- pure-JAX reference -----------------------------
def crf_log_likelihood_ref(logits, tags, mask, transitions,
                           start_transitions, end_transitions):
    B, T, N = logits.shape
    maskf = mask.astype(jnp.float32)

    # denominator
    alpha = start_transitions[None, :] + logits[:, 0, :]
    for i in range(1, T):
        inner = alpha[:, :, None] + logits[:, i, :][:, None, :] + transitions[None, :, :]
        new_alpha = jax.nn.logsumexp(inner, axis=1)
        m = maskf[:, i][:, None]
        alpha = new_alpha * m + alpha * (1.0 - m)
    log_den = jax.nn.logsumexp(alpha + end_transitions[None, :], axis=-1)

    # numerator
    score = start_transitions[tags[:, 0]]
    for i in range(T - 1):
        cur, nxt = tags[:, i], tags[:, i + 1]
        trans_score = transitions[cur, nxt]
        emit = jnp.take_along_axis(logits[:, i, :], cur[:, None], axis=1)[:, 0]
        score = score + trans_score * maskf[:, i + 1] + emit * maskf[:, i]
    last_idx = jnp.sum(maskf, axis=1).astype(jnp.int32) - 1
    last_tags = jnp.take_along_axis(tags, last_idx[:, None], axis=1)[:, 0]
    last_trans = end_transitions[last_tags]
    last_input = jnp.take_along_axis(logits[:, T - 1, :], last_tags[:, None], axis=1)[:, 0]
    score = score + last_trans + last_input * maskf[:, T - 1]
    return jnp.sum(score - log_den)


# TODO(synk): viterbi_tags (constrained Viterbi decode with per-sequence host
# loop) is not part of forward() and is not implemented as a Pallas kernel.

if __name__ == "__main__":
    key = jax.random.PRNGKey(0)

    def make_case(k, B, T, N):
        k_logits, k_tags, k_len, k_trans, k_start, k_end = jax.random.split(k, 6)
        logits = jax.random.normal(k_logits, (B, T, N), dtype=jnp.float32)
        tags = jax.random.randint(k_tags, (B, T), 0, N, dtype=jnp.int32)
        lengths = jax.random.randint(k_len, (B,), 1, T + 1, dtype=jnp.int32)
        lengths = lengths.at[0].set(T)
        mask = (jnp.arange(T)[None, :] < lengths[:, None]).astype(jnp.int32)
        # parameter init mirroring reset_parameters():
        #   transitions ~ xavier_normal, start/end ~ standard normal
        xavier_std = (2.0 / (N + N)) ** 0.5
        transitions = jax.random.normal(k_trans, (N, N), dtype=jnp.float32) * xavier_std
        start_transitions = jax.random.normal(k_start, (N,), dtype=jnp.float32)
        end_transitions = jax.random.normal(k_end, (N,), dtype=jnp.float32)
        return logits, tags, mask, transitions, start_transitions, end_transitions

    k1, k2 = jax.random.split(key)

    # Case 1: small shapes, single-block grid.
    args1 = make_case(k1, B=2, T=8, N=8)
    out1 = jax.block_until_ready(crf_log_likelihood(*args1))
    ref1 = crf_log_likelihood_ref(*args1)
    assert jnp.allclose(out1, ref1, rtol=2e-3, atol=1e-2), (out1, ref1)

    # Case 2: forced small tiles -> multi-block grid (exercises the carried
    # alpha scratch across T blocks and batch-tile padding).
    args2 = make_case(k2, B=10, T=24, N=12)
    out2 = jax.block_until_ready(
        crf_log_likelihood(*args2, batch_tile=8, time_block=8))
    ref2 = crf_log_likelihood_ref(*args2)
    assert jnp.allclose(out2, ref2, rtol=2e-3, atol=1e-2), (out2, ref2)

    print("KERNEL_OK")
</pallas_src>

<mosaic_0001>
module attributes {stable_mosaic.version = 11 : i64} {
  func.func @_crf_denominator_kernel(%arg0: i32, %arg1: i32, %arg2: memref<8x1xi32, #tpu.memory_space<vmem>>, %arg3: memref<8x8x128xf32, #tpu.memory_space<vmem>>, %arg4: memref<128x128xf32, #tpu.memory_space<vmem>>, %arg5: memref<1x128xf32, #tpu.memory_space<vmem>>, %arg6: memref<1x128xf32, #tpu.memory_space<vmem>>, %arg7: memref<8x1xf32, #tpu.memory_space<vmem>>, %arg8: memref<8x128xf32, #tpu.memory_space<vmem>>) attributes {dimension_semantics = [#tpu.dimension_semantics<parallel>, #tpu.dimension_semantics<arbitrary>], iteration_bounds = array<i64: 1, 1>, scalar_prefetch = 0 : i64, scratch_operands = 1 : i64, tpu.core_type = #tpu.core_type<tc>, window_params = [{transform_indices = @transform_0, window_bounds = array<i64: 8, 1>}, {transform_indices = @transform_1, window_bounds = array<i64: 8, 8, 128>}, {pipeline_mode = #tpu.pipeline_mode<synchronous>, transform_indices = @transform_2, window_bounds = array<i64: 128, 128>}, {pipeline_mode = #tpu.pipeline_mode<synchronous>, transform_indices = @transform_3, window_bounds = array<i64: 1, 128>}, {pipeline_mode = #tpu.pipeline_mode<synchronous>, transform_indices = @transform_4, window_bounds = array<i64: 1, 128>}, {transform_indices = @transform_5, window_bounds = array<i64: 8, 1>}]} {
    %c0 = arith.constant 0 : index
    %c0_0 = arith.constant 0 : index
    %0 = vector.load %arg4[%c0, %c0_0] : memref<128x128xf32, #tpu.memory_space<vmem>>, vector<128x128xf32>
    %c0_1 = arith.constant 0 : index
    %c0_2 = arith.constant 0 : index
    %1 = vector.load %arg5[%c0_1, %c0_2] : memref<1x128xf32, #tpu.memory_space<vmem>>, vector<1x128xf32>
    %c0_3 = arith.constant 0 : index
    %c0_4 = arith.constant 0 : index
    %2 = vector.load %arg6[%c0_3, %c0_4] : memref<1x128xf32, #tpu.memory_space<vmem>>, vector<1x128xf32>
    %c0_5 = arith.constant 0 : index
    %c0_6 = arith.constant 0 : index
    %3 = vector.load %arg2[%c0_5, %c0_6] : memref<8x1xi32, #tpu.memory_space<vmem>>, vector<8x1xi32>
    %4 = tpu.iota {dimensions = array<i32: 1>} : vector<1x128xi32>
    %c8_i32 = arith.constant 8 : i32
    %5 = vector.broadcast %c8_i32 : i32 to vector<1x128xi32>
    %6 = arith.cmpi slt, %4, %5 : vector<1x128xi32>
    %c0_i32 = arith.constant 0 : i32
    %7 = arith.cmpi eq, %arg1, %c0_i32 : i32
    %8 = arith.extui %7 : i1 to i32
    %c0_i32_7 = arith.constant 0 : i32
    %9 = arith.cmpi ne, %8, %c0_i32_7 : i32
    scf.if %9 {
      %c0_89 = arith.constant 0 : index
      %c0_90 = arith.constant 0 : index
      %c0_91 = arith.constant 0 : index
      %296 = vector.load %arg3[%c0_89, %c0_90, %c0_91] : memref<8x8x128xf32, #tpu.memory_space<vmem>>, vector<1x8x128xf32>
      %297 = vector.shape_cast %296 : vector<1x8x128xf32> to vector<8x128xf32>
      %298 = vector.broadcast %1 : vector<1x128xf32> to vector<8x128xf32>
      %299 = arith.addf %298, %297 : vector<8x128xf32>
      %c0_92 = arith.constant 0 : index
      %c0_93 = arith.constant 0 : index
      %300 = vector.load %arg8[%c0_92, %c0_93] : memref<8x128xf32, #tpu.memory_space<vmem>>, vector<8x128xf32>
      tpu.vector_store %arg8[%c0_92, %c0_93], %299 {strides = array<i32>} : memref<8x128xf32, #tpu.memory_space<vmem>>, vector<8x128xf32>,
    } else {
    }
    %c8_i32_8 = arith.constant 8 : i32
    %10 = arith.muli %arg1, %c8_i32_8 : i32
    %c0_9 = arith.constant 0 : index
    %c0_10 = arith.constant 0 : index
    %11 = vector.load %arg8[%c0_9, %c0_10] : memref<8x128xf32, #tpu.memory_space<vmem>>, vector<8x128xf32>
    %cst = arith.constant -1.000000e+30 : f32
    %c0_i32_11 = arith.constant 0 : i32
    %12 = arith.index_cast %c0_i32_11 : i32 to index
    %c0_12 = arith.constant 0 : index
    %c0_13 = arith.constant 0 : index
    %13 = vector.load %arg3[%12, %c0_12, %c0_13] : memref<8x8x128xf32, #tpu.memory_space<vmem>>, vector<1x8x128xf32>
    %14 = vector.shape_cast %13 : vector<1x8x128xf32> to vector<8x128xf32>
    %cst_14 = arith.constant dense<0xFF800000> : vector<8xf32>
    %15 = vector.multi_reduction <maximumf>, %11, %cst_14 [1] : vector<8x128xf32> to vector<8xf32>
    %16 = vector.shape_cast %15 : vector<8xf32> to vector<8x1xf32>
    %17 = vector.broadcast %16 : vector<8x1xf32> to vector<8x128xf32>
    %18 = arith.subf %11, %17 : vector<8x128xf32>
    %19 = math.exp %18 : vector<8x128xf32>
    %cst_15 = arith.constant dense<0.000000e+00> : vector<8x128xf32>
    %20 = tpu.matmul %19, %0, %cst_15 {dimension_numbers = #tpu.dot_dimension_numbers<[1], [0], [0], [1], [0, 0, 1, 1], [], []>} : vector<8x128xf32>, vector<128x128xf32>, vector<8x128xf32> -> vector<8x128xf32>
    %21 = vector.broadcast %16 : vector<8x1xf32> to vector<8x128xf32>
    %22 = arith.addf %14, %21 : vector<8x128xf32>
    %cst_16 = arith.constant 9.99999991E-38 : f32
    %23 = vector.broadcast %cst_16 : f32 to vector<8x128xf32>
    %24 = arith.maximumf %20, %23 : vector<8x128xf32>
    %25 = math.log %24 : vector<8x128xf32>
    %26 = arith.addf %22, %25 : vector<8x128xf32>
    %27 = vector.shape_cast %6 : vector<1x128xi1> to vector<1x128xi1>
    %28 = vector.broadcast %27 : vector<1x128xi1> to vector<8x128xi1>
    %29 = vector.broadcast %cst : f32 to vector<8x128xf32>
    %30 = arith.select %28, %26, %29 : vector<8x128xi1>, vector<8x128xf32>
    %31 = arith.addi %10, %c0_i32_11 : i32
    %c1_i32 = arith.constant 1 : i32
    %32 = arith.cmpi sge, %31, %c1_i32 : i32
    %33 = vector.broadcast %31 : i32 to vector<8x1xi32>
    %34 = arith.cmpi slt, %33, %3 : vector<8x1xi32>
    %35 = vector.broadcast %32 : i1 to vector<8x1xi1>
    %36 = arith.andi %35, %34 : vector<8x1xi1>
    %cst_17 = arith.constant 1.000000e+00 : f32
    %cst_18 = arith.constant 0.000000e+00 : f32
    %37 = vector.broadcast %cst_17 : f32 to vector<8x1xf32>
    %38 = vector.broadcast %cst_18 : f32 to vector<8x1xf32>
    %39 = arith.select %36, %37, %38 : vector<8x1xi1>, vector<8x1xf32>
    %40 = vector.broadcast %39 : vector<8x1xf32> to vector<8x128xf32>
    %41 = arith.mulf %30, %40 : vector<8x128xf32>
    %cst_19 = arith.constant 1.000000e+00 : f32
    %42 = vector.broadcast %cst_19 : f32 to vector<8x1xf32>
    %43 = arith.subf %42, %39 : vector<8x1xf32>
    %44 = vector.broadcast %43 : vector<8x1xf32> to vector<8x128xf32>
    %45 = arith.mulf %11, %44 : vector<8x128xf32>
    %46 = arith.addf %41, %45 : vector<8x128xf32>
    %c1_i32_20 = arith.constant 1 : i32
    %47 = arith.index_cast %c1_i32_20 : i32 to index
    %c0_21 = arith.constant 0 : index
    %c0_22 = arith.constant 0 : index
    %48 = vector.load %arg3[%47, %c0_21, %c0_22] : memref<8x8x128xf32, #tpu.memory_space<vmem>>, vector<1x8x128xf32>
    %49 = vector.shape_cast %48 : vector<1x8x128xf32> to vector<8x128xf32>
    %cst_23 = arith.constant dense<0xFF800000> : vector<8xf32>
    %50 = vector.multi_reduction <maximumf>, %46, %cst_23 [1] : vector<8x128xf32> to vector<8xf32>
    %51 = vector.shape_cast %50 : vector<8xf32> to vector<8x1xf32>
    %52 = vector.broadcast %51 : vector<8x1xf32> to vector<8x128xf32>
    %53 = arith.subf %46, %52 : vector<8x128xf32>
    %54 = math.exp %53 : vector<8x128xf32>
    %cst_24 = arith.constant dense<0.000000e+00> : vector<8x128xf32>
    %55 = tpu.matmul %54, %0, %cst_24 {dimension_numbers = #tpu.dot_dimension_numbers<[1], [0], [0], [1], [0, 0, 1, 1], [], []>} : vector<8x128xf32>, vector<128x128xf32>, vector<8x128xf32> -> vector<8x128xf32>
    %56 = vector.broadcast %51 : vector<8x1xf32> to vector<8x128xf32>
    %57 = arith.addf %49, %56 : vector<8x128xf32>
    %cst_25 = arith.constant 9.99999991E-38 : f32
    %58 = vector.broadcast %cst_25 : f32 to vector<8x128xf32>
    %59 = arith.maximumf %55, %58 : vector<8x128xf32>
    %60 = math.log %59 : vector<8x128xf32>
    %61 = arith.addf %57, %60 : vector<8x128xf32>
    %62 = vector.shape_cast %6 : vector<1x128xi1> to vector<1x128xi1>
    %63 = vector.broadcast %62 : vector<1x128xi1> to vector<8x128xi1>
    %64 = vector.broadcast %cst : f32 to vector<8x128xf32>
    %65 = arith.select %63, %61, %64 : vector<8x128xi1>, vector<8x128xf32>
    %66 = arith.addi %10, %c1_i32_20 : i32
    %c1_i32_26 = arith.constant 1 : i32
    %67 = arith.cmpi sge, %66, %c1_i32_26 : i32
    %68 = vector.broadcast %66 : i32 to vector<8x1xi32>
    %69 = arith.cmpi slt, %68, %3 : vector<8x1xi32>
    %70 = vector.broadcast %67 : i1 to vector<8x1xi1>
    %71 = arith.andi %70, %69 : vector<8x1xi1>
    %cst_27 = arith.constant 1.000000e+00 : f32
    %cst_28 = arith.constant 0.000000e+00 : f32
    %72 = vector.broadcast %cst_27 : f32 to vector<8x1xf32>
    %73 = vector.broadcast %cst_28 : f32 to vector<8x1xf32>
    %74 = arith.select %71, %72, %73 : vector<8x1xi1>, vector<8x1xf32>
    %75 = vector.broadcast %74 : vector<8x1xf32> to vector<8x128xf32>
    %76 = arith.mulf %65, %75 : vector<8x128xf32>
    %cst_29 = arith.constant 1.000000e+00 : f32
    %77 = vector.broadcast %cst_29 : f32 to vector<8x1xf32>
    %78 = arith.subf %77, %74 : vector<8x1xf32>
    %79 = vector.broadcast %78 : vector<8x1xf32> to vector<8x128xf32>
    %80 = arith.mulf %46, %79 : vector<8x128xf32>
    %81 = arith.addf %76, %80 : vector<8x128xf32>
    %c2_i32 = arith.constant 2 : i32
    %82 = arith.index_cast %c2_i32 : i32 to index
    %c0_30 = arith.constant 0 : index
    %c0_31 = arith.constant 0 : index
    %83 = vector.load %arg3[%82, %c0_30, %c0_31] : memref<8x8x128xf32, #tpu.memory_space<vmem>>, vector<1x8x128xf32>
    %84 = vector.shape_cast %83 : vector<1x8x128xf32> to vector<8x128xf32>
    %cst_32 = arith.constant dense<0xFF800000> : vector<8xf32>
    %85 = vector.multi_reduction <maximumf>, %81, %cst_32 [1] : vector<8x128xf32> to vector<8xf32>
    %86 = vector.shape_cast %85 : vector<8xf32> to vector<8x1xf32>
    %87 = vector.broadcast %86 : vector<8x1xf32> to vector<8x128xf32>
    %88 = arith.subf %81, %87 : vector<8x128xf32>
    %89 = math.exp %88 : vector<8x128xf32>
    %cst_33 = arith.constant dense<0.000000e+00> : vector<8x128xf32>
    %90 = tpu.matmul %89, %0, %cst_33 {dimension_numbers = #tpu.dot_dimension_numbers<[1], [0], [0], [1], [0, 0, 1, 1], [], []>} : vector<8x128xf32>, vector<128x128xf32>, vector<8x128xf32> -> vector<8x128xf32>
    %91 = vector.broadcast %86 : vector<8x1xf32> to vector<8x128xf32>
    %92 = arith.addf %84, %91 : vector<8x128xf32>
    %cst_34 = arith.constant 9.99999991E-38 : f32
    %93 = vector.broadcast %cst_34 : f32 to vector<8x128xf32>
    %94 = arith.maximumf %90, %93 : vector<8x128xf32>
    %95 = math.log %94 : vector<8x128xf32>
    %96 = arith.addf %92, %95 : vector<8x128xf32>
    %97 = vector.shape_cast %6 : vector<1x128xi1> to vector<1x128xi1>
    %98 = vector.broadcast %97 : vector<1x128xi1> to vector<8x128xi1>
    %99 = vector.broadcast %cst : f32 to vector<8x128xf32>
    %100 = arith.select %98, %96, %99 : vector<8x128xi1>, vector<8x128xf32>
    %101 = arith.addi %10, %c2_i32 : i32
    %c1_i32_35 = arith.constant 1 : i32
    %102 = arith.cmpi sge, %101, %c1_i32_35 : i32
    %103 = vector.broadcast %101 : i32 to vector<8x1xi32>
    %104 = arith.cmpi slt, %103, %3 : vector<8x1xi32>
    %105 = vector.broadcast %102 : i1 to vector<8x1xi1>
    %106 = arith.andi %105, %104 : vector<8x1xi1>
    %cst_36 = arith.constant 1.000000e+00 : f32
    %cst_37 = arith.constant 0.000000e+00 : f32
    %107 = vector.broadcast %cst_36 : f32 to vector<8x1xf32>
    %108 = vector.broadcast %cst_37 : f32 to vector<8x1xf32>
    %109 = arith.select %106, %107, %108 : vector<8x1xi1>, vector<8x1xf32>
    %110 = vector.broadcast %109 : vector<8x1xf32> to vector<8x128xf32>
    %111 = arith.mulf %100, %110 : vector<8x128xf32>
    %cst_38 = arith.constant 1.000000e+00 : f32
    %112 = vector.broadcast %cst_38 : f32 to vector<8x1xf32>
    %113 = arith.subf %112, %109 : vector<8x1xf32>
    %114 = vector.broadcast %113 : vector<8x1xf32> to vector<8x128xf32>
    %115 = arith.mulf %81, %114 : vector<8x128xf32>
    %116 = arith.addf %111, %115 : vector<8x128xf32>
    %c3_i32 = arith.constant 3 : i32
    %117 = arith.index_cast %c3_i32 : i32 to index
    %c0_39 = arith.constant 0 : index
    %c0_40 = arith.constant 0 : index
    %118 = vector.load %arg3[%117, %c0_39, %c0_40] : memref<8x8x128xf32, #tpu.memory_space<vmem>>, vector<1x8x128xf32>
    %119 = vector.shape_cast %118 : vector<1x8x128xf32> to vector<8x128xf32>
    %cst_41 = arith.constant dense<0xFF800000> : vector<8xf32>
    %120 = vector.multi_reduction <maximumf>, %116, %cst_41 [1] : vector<8x128xf32> to vector<8xf32>
    %121 = vector.shape_cast %120 : vector<8xf32> to vector<8x1xf32>
    %122 = vector.broadcast %121 : vector<8x1xf32> to vector<8x128xf32>
    %123 = arith.subf %116, %122 : vector<8x128xf32>
    %124 = math.exp %123 : vector<8x128xf32>
    %cst_42 = arith.constant dense<0.000000e+00> : vector<8x128xf32>
    %125 = tpu.matmul %124, %0, %cst_42 {dimension_numbers = #tpu.dot_dimension_numbers<[1], [0], [0], [1], [0, 0, 1, 1], [], []>} : vector<8x128xf32>, vector<128x128xf32>, vector<8x128xf32> -> vector<8x128xf32>
    %126 = vector.broadcast %121 : vector<8x1xf32> to vector<8x128xf32>
    %127 = arith.addf %119, %126 : vector<8x128xf32>
    %cst_43 = arith.constant 9.99999991E-38 : f32
    %128 = vector.broadcast %cst_43 : f32 to vector<8x128xf32>
    %129 = arith.maximumf %125, %128 : vector<8x128xf32>
    %130 = math.log %129 : vector<8x128xf32>
    %131 = arith.addf %127, %130 : vector<8x128xf32>
    %132 = vector.shape_cast %6 : vector<1x128xi1> to vector<1x128xi1>
    %133 = vector.broadcast %132 : vector<1x128xi1> to vector<8x128xi1>
    %134 = vector.broadcast %cst : f32 to vector<8x128xf32>
    %135 = arith.select %133, %131, %134 : vector<8x128xi1>, vector<8x128xf32>
    %136 = arith.addi %10, %c3_i32 : i32
    %c1_i32_44 = arith.constant 1 : i32
    %137 = arith.cmpi sge, %136, %c1_i32_44 : i32
    %138 = vector.broadcast %136 : i32 to vector<8x1xi32>
    %139 = arith.cmpi slt, %138, %3 : vector<8x1xi32>
    %140 = vector.broadcast %137 : i1 to vector<8x1xi1>
    %141 = arith.andi %140, %139 : vector<8x1xi1>
    %cst_45 = arith.constant 1.000000e+00 : f32
    %cst_46 = arith.constant 0.000000e+00 : f32
    %142 = vector.broadcast %cst_45 : f32 to vector<8x1xf32>
    %143 = vector.broadcast %cst_46 : f32 to vector<8x1xf32>
    %144 = arith.select %141, %142, %143 : vector<8x1xi1>, vector<8x1xf32>
    %145 = vector.broadcast %144 : vector<8x1xf32> to vector<8x128xf32>
    %146 = arith.mulf %135, %145 : vector<8x128xf32>
    %cst_47 = arith.constant 1.000000e+00 : f32
    %147 = vector.broadcast %cst_47 : f32 to vector<8x1xf32>
    %148 = arith.subf %147, %144 : vector<8x1xf32>
    %149 = vector.broadcast %148 : vector<8x1xf32> to vector<8x128xf32>
    %150 = arith.mulf %116, %149 : vector<8x128xf32>
    %151 = arith.addf %146, %150 : vector<8x128xf32>
    %c4_i32 = arith.constant 4 : i32
    %152 = arith.index_cast %c4_i32 : i32 to index
    %c0_48 = arith.constant 0 : index
    %c0_49 = arith.constant 0 : index
    %153 = vector.load %arg3[%152, %c0_48, %c0_49] : memref<8x8x128xf32, #tpu.memory_space<vmem>>, vector<1x8x128xf32>
    %154 = vector.shape_cast %153 : vector<1x8x128xf32> to vector<8x128xf32>
    %cst_50 = arith.constant dense<0xFF800000> : vector<8xf32>
    %155 = vector.multi_reduction <maximumf>, %151, %cst_50 [1] : vector<8x128xf32> to vector<8xf32>
    %156 = vector.shape_cast %155 : vector<8xf32> to vector<8x1xf32>
    %157 = vector.broadcast %156 : vector<8x1xf32> to vector<8x128xf32>
    %158 = arith.subf %151, %157 : vector<8x128xf32>
    %159 = math.exp %158 : vector<8x128xf32>
    %cst_51 = arith.constant dense<0.000000e+00> : vector<8x128xf32>
    %160 = tpu.matmul %159, %0, %cst_51 {dimension_numbers = #tpu.dot_dimension_numbers<[1], [0], [0], [1], [0, 0, 1, 1], [], []>} : vector<8x128xf32>, vector<128x128xf32>, vector<8x128xf32> -> vector<8x128xf32>
    %161 = vector.broadcast %156 : vector<8x1xf32> to vector<8x128xf32>
    %162 = arith.addf %154, %161 : vector<8x128xf32>
    %cst_52 = arith.constant 9.99999991E-38 : f32
    %163 = vector.broadcast %cst_52 : f32 to vector<8x128xf32>
    %164 = arith.maximumf %160, %163 : vector<8x128xf32>
    %165 = math.log %164 : vector<8x128xf32>
    %166 = arith.addf %162, %165 : vector<8x128xf32>
    %167 = vector.shape_cast %6 : vector<1x128xi1> to vector<1x128xi1>
    %168 = vector.broadcast %167 : vector<1x128xi1> to vector<8x128xi1>
    %169 = vector.broadcast %cst : f32 to vector<8x128xf32>
    %170 = arith.select %168, %166, %169 : vector<8x128xi1>, vector<8x128xf32>
    %171 = arith.addi %10, %c4_i32 : i32
    %c1_i32_53 = arith.constant 1 : i32
    %172 = arith.cmpi sge, %171, %c1_i32_53 : i32
    %173 = vector.broadcast %171 : i32 to vector<8x1xi32>
    %174 = arith.cmpi slt, %173, %3 : vector<8x1xi32>
    %175 = vector.broadcast %172 : i1 to vector<8x1xi1>
    %176 = arith.andi %175, %174 : vector<8x1xi1>
    %cst_54 = arith.constant 1.000000e+00 : f32
    %cst_55 = arith.constant 0.000000e+00 : f32
    %177 = vector.broadcast %cst_54 : f32 to vector<8x1xf32>
    %178 = vector.broadcast %cst_55 : f32 to vector<8x1xf32>
    %179 = arith.select %176, %177, %178 : vector<8x1xi1>, vector<8x1xf32>
    %180 = vector.broadcast %179 : vector<8x1xf32> to vector<8x128xf32>
    %181 = arith.mulf %170, %180 : vector<8x128xf32>
    %cst_56 = arith.constant 1.000000e+00 : f32
    %182 = vector.broadcast %cst_56 : f32 to vector<8x1xf32>
    %183 = arith.subf %182, %179 : vector<8x1xf32>
    %184 = vector.broadcast %183 : vector<8x1xf32> to vector<8x128xf32>
    %185 = arith.mulf %151, %184 : vector<8x128xf32>
    %186 = arith.addf %181, %185 : vector<8x128xf32>
    %c5_i32 = arith.constant 5 : i32
    %187 = arith.index_cast %c5_i32 : i32 to index
    %c0_57 = arith.constant 0 : index
    %c0_58 = arith.constant 0 : index
    %188 = vector.load %arg3[%187, %c0_57, %c0_58] : memref<8x8x128xf32, #tpu.memory_space<vmem>>, vector<1x8x128xf32>
    %189 = vector.shape_cast %188 : vector<1x8x128xf32> to vector<8x128xf32>
    %cst_59 = arith.constant dense<0xFF800000> : vector<8xf32>
    %190 = vector.multi_reduction <maximumf>, %186, %cst_59 [1] : vector<8x128xf32> to vector<8xf32>
    %191 = vector.shape_cast %190 : vector<8xf32> to vector<8x1xf32>
    %192 = vector.broadcast %191 : vector<8x1xf32> to vector<8x128xf32>
    %193 = arith.subf %186, %192 : vector<8x128xf32>
    %194 = math.exp %193 : vector<8x128xf32>
    %cst_60 = arith.constant dense<0.000000e+00> : vector<8x128xf32>
    %195 = tpu.matmul %194, %0, %cst_60 {dimension_numbers = #tpu.dot_dimension_numbers<[1], [0], [0], [1], [0, 0, 1, 1], [], []>} : vector<8x128xf32>, vector<128x128xf32>, vector<8x128xf32> -> vector<8x128xf32>
    %196 = vector.broadcast %191 : vector<8x1xf32> to vector<8x128xf32>
    %197 = arith.addf %189, %196 : vector<8x128xf32>
    %cst_61 = arith.constant 9.99999991E-38 : f32
    %198 = vector.broadcast %cst_61 : f32 to vector<8x128xf32>
    %199 = arith.maximumf %195, %198 : vector<8x128xf32>
    %200 = math.log %199 : vector<8x128xf32>
    %201 = arith.addf %197, %200 : vector<8x128xf32>
    %202 = vector.shape_cast %6 : vector<1x128xi1> to vector<1x128xi1>
    %203 = vector.broadcast %202 : vector<1x128xi1> to vector<8x128xi1>
    %204 = vector.broadcast %cst : f32 to vector<8x128xf32>
    %205 = arith.select %203, %201, %204 : vector<8x128xi1>, vector<8x128xf32>
    %206 = arith.addi %10, %c5_i32 : i32
    %c1_i32_62 = arith.constant 1 : i32
    %207 = arith.cmpi sge, %206, %c1_i32_62 : i32
    %208 = vector.broadcast %206 : i32 to vector<8x1xi32>
    %209 = arith.cmpi slt, %208, %3 : vector<8x1xi32>
    %210 = vector.broadcast %207 : i1 to vector<8x1xi1>
    %211 = arith.andi %210, %209 : vector<8x1xi1>
    %cst_63 = arith.constant 1.000000e+00 : f32
    %cst_64 = arith.constant 0.000000e+00 : f32
    %212 = vector.broadcast %cst_63 : f32 to vector<8x1xf32>
    %213 = vector.broadcast %cst_64 : f32 to vector<8x1xf32>
    %214 = arith.select %211, %212, %213 : vector<8x1xi1>, vector<8x1xf32>
    %215 = vector.broadcast %214 : vector<8x1xf32> to vector<8x128xf32>
    %216 = arith.mulf %205, %215 : vector<8x128xf32>
    %cst_65 = arith.constant 1.000000e+00 : f32
    %217 = vector.broadcast %cst_65 : f32 to vector<8x1xf32>
    %218 = arith.subf %217, %214 : vector<8x1xf32>
    %219 = vector.broadcast %218 : vector<8x1xf32> to vector<8x128xf32>
    %220 = arith.mulf %186, %219 : vector<8x128xf32>
    %221 = arith.addf %216, %220 : vector<8x128xf32>
    %c6_i32 = arith.constant 6 : i32
    %222 = arith.index_cast %c6_i32 : i32 to index
    %c0_66 = arith.constant 0 : index
    %c0_67 = arith.constant 0 : index
    %223 = vector.load %arg3[%222, %c0_66, %c0_67] : memref<8x8x128xf32, #tpu.memory_space<vmem>>, vector<1x8x128xf32>
    %224 = vector.shape_cast %223 : vector<1x8x128xf32> to vector<8x128xf32>
    %cst_68 = arith.constant dense<0xFF800000> : vector<8xf32>
    %225 = vector.multi_reduction <maximumf>, %221, %cst_68 [1] : vector<8x128xf32> to vector<8xf32>
    %226 = vector.shape_cast %225 : vector<8xf32> to vector<8x1xf32>
    %227 = vector.broadcast %226 : vector<8x1xf32> to vector<8x128xf32>
    %228 = arith.subf %221, %227 : vector<8x128xf32>
    %229 = math.exp %228 : vector<8x128xf32>
    %cst_69 = arith.constant dense<0.000000e+00> : vector<8x128xf32>
    %230 = tpu.matmul %229, %0, %cst_69 {dimension_numbers = #tpu.dot_dimension_numbers<[1], [0], [0], [1], [0, 0, 1, 1], [], []>} : vector<8x128xf32>, vector<128x128xf32>, vector<8x128xf32> -> vector<8x128xf32>
    %231 = vector.broadcast %226 : vector<8x1xf32> to vector<8x128xf32>
    %232 = arith.addf %224, %231 : vector<8x128xf32>
    %cst_70 = arith.constant 9.99999991E-38 : f32
    %233 = vector.broadcast %cst_70 : f32 to vector<8x128xf32>
    %234 = arith.maximumf %230, %233 : vector<8x128xf32>
    %235 = math.log %234 : vector<8x128xf32>
    %236 = arith.addf %232, %235 : vector<8x128xf32>
    %237 = vector.shape_cast %6 : vector<1x128xi1> to vector<1x128xi1>
    %238 = vector.broadcast %237 : vector<1x128xi1> to vector<8x128xi1>
    %239 = vector.broadcast %cst : f32 to vector<8x128xf32>
    %240 = arith.select %238, %236, %239 : vector<8x128xi1>, vector<8x128xf32>
    %241 = arith.addi %10, %c6_i32 : i32
    %c1_i32_71 = arith.constant 1 : i32
    %242 = arith.cmpi sge, %241, %c1_i32_71 : i32
    %243 = vector.broadcast %241 : i32 to vector<8x1xi32>
    %244 = arith.cmpi slt, %243, %3 : vector<8x1xi32>
    %245 = vector.broadcast %242 : i1 to vector<8x1xi1>
    %246 = arith.andi %245, %244 : vector<8x1xi1>
    %cst_72 = arith.constant 1.000000e+00 : f32
    %cst_73 = arith.constant 0.000000e+00 : f32
    %247 = vector.broadcast %cst_72 : f32 to vector<8x1xf32>
    %248 = vector.broadcast %cst_73 : f32 to vector<8x1xf32>
    %249 = arith.select %246, %247, %248 : vector<8x1xi1>, vector<8x1xf32>
    %250 = vector.broadcast %249 : vector<8x1xf32> to vector<8x128xf32>
    %251 = arith.mulf %240, %250 : vector<8x128xf32>
    %cst_74 = arith.constant 1.000000e+00 : f32
    %252 = vector.broadcast %cst_74 : f32 to vector<8x1xf32>
    %253 = arith.subf %252, %249 : vector<8x1xf32>
    %254 = vector.broadcast %253 : vector<8x1xf32> to vector<8x128xf32>
    %255 = arith.mulf %221, %254 : vector<8x128xf32>
    %256 = arith.addf %251, %255 : vector<8x128xf32>
    %c7_i32 = arith.constant 7 : i32
    %257 = arith.index_cast %c7_i32 : i32 to index
    %c0_75 = arith.constant 0 : index
    %c0_76 = arith.constant 0 : index
    %258 = vector.load %arg3[%257, %c0_75, %c0_76] : memref<8x8x128xf32, #tpu.memory_space<vmem>>, vector<1x8x128xf32>
    %259 = vector.shape_cast %258 : vector<1x8x128xf32> to vector<8x128xf32>
    %cst_77 = arith.constant dense<0xFF800000> : vector<8xf32>
    %260 = vector.multi_reduction <maximumf>, %256, %cst_77 [1] : vector<8x128xf32> to vector<8xf32>
    %261 = vector.shape_cast %260 : vector<8xf32> to vector<8x1xf32>
    %262 = vector.broadcast %261 : vector<8x1xf32> to vector<8x128xf32>
    %263 = arith.subf %256, %262 : vector<8x128xf32>
    %264 = math.exp %263 : vector<8x128xf32>
    %cst_78 = arith.constant dense<0.000000e+00> : vector<8x128xf32>
    %265 = tpu.matmul %264, %0, %cst_78 {dimension_numbers = #tpu.dot_dimension_numbers<[1], [0], [0], [1], [0, 0, 1, 1], [], []>} : vector<8x128xf32>, vector<128x128xf32>, vector<8x128xf32> -> vector<8x128xf32>
    %266 = vector.broadcast %261 : vector<8x1xf32> to vector<8x128xf32>
    %267 = arith.addf %259, %266 : vector<8x128xf32>
    %cst_79 = arith.constant 9.99999991E-38 : f32
    %268 = vector.broadcast %cst_79 : f32 to vector<8x128xf32>
    %269 = arith.maximumf %265, %268 : vector<8x128xf32>
    %270 = math.log %269 : vector<8x128xf32>
    %271 = arith.addf %267, %270 : vector<8x128xf32>
    %272 = vector.shape_cast %6 : vector<1x128xi1> to vector<1x128xi1>
    %273 = vector.broadcast %272 : vector<1x128xi1> to vector<8x128xi1>
    %274 = vector.broadcast %cst : f32 to vector<8x128xf32>
    %275 = arith.select %273, %271, %274 : vector<8x128xi1>, vector<8x128xf32>
    %276 = arith.addi %10, %c7_i32 : i32
    %c1_i32_80 = arith.constant 1 : i32
    %277 = arith.cmpi sge, %276, %c1_i32_80 : i32
    %278 = vector.broadcast %276 : i32 to vector<8x1xi32>
    %279 = arith.cmpi slt, %278, %3 : vector<8x1xi32>
    %280 = vector.broadcast %277 : i1 to vector<8x1xi1>
    %281 = arith.andi %280, %279 : vector<8x1xi1>
    %cst_81 = arith.constant 1.000000e+00 : f32
    %cst_82 = arith.constant 0.000000e+00 : f32
    %282 = vector.broadcast %cst_81 : f32 to vector<8x1xf32>
    %283 = vector.broadcast %cst_82 : f32 to vector<8x1xf32>
    %284 = arith.select %281, %282, %283 : vector<8x1xi1>, vector<8x1xf32>
    %285 = vector.broadcast %284 : vector<8x1xf32> to vector<8x128xf32>
    %286 = arith.mulf %275, %285 : vector<8x128xf32>
    %cst_83 = arith.constant 1.000000e+00 : f32
    %287 = vector.broadcast %cst_83 : f32 to vector<8x1xf32>
    %288 = arith.subf %287, %284 : vector<8x1xf32>
    %289 = vector.broadcast %288 : vector<8x1xf32> to vector<8x128xf32>
    %290 = arith.mulf %256, %289 : vector<8x128xf32>
    %291 = arith.addf %286, %290 : vector<8x128xf32>
    %c8_i32_84 = arith.constant 8 : i32
    %c0_85 = arith.constant 0 : index
    %c0_86 = arith.constant 0 : index
    %292 = vector.load %arg8[%c0_85, %c0_86] : memref<8x128xf32, #tpu.memory_space<vmem>>, vector<8x128xf32>
    tpu.vector_store %arg8[%c0_85, %c0_86], %291 {strides = array<i32>} : memref<8x128xf32, #tpu.memory_space<vmem>>, vector<8x128xf32>,
    %c0_i32_87 = arith.constant 0 : i32
    %293 = arith.cmpi eq, %arg1, %c0_i32_87 : i32
    %294 = arith.extui %293 : i1 to i32
    %c0_i32_88 = arith.constant 0 : i32
    %295 = arith.cmpi ne, %294, %c0_i32_88 : i32
    scf.if %295 {
      %c0_89 = arith.constant 0 : index
      %c0_90 = arith.constant 0 : index
      %296 = vector.load %arg8[%c0_89, %c0_90] : memref<8x128xf32, #tpu.memory_space<vmem>>, vector<8x128xf32>
      %297 = vector.broadcast %2 : vector<1x128xf32> to vector<8x128xf32>
      %298 = arith.addf %296, %297 : vector<8x128xf32>
      %cst_91 = arith.constant dense<0xFF800000> : vector<8xf32>
      %299 = vector.multi_reduction <maximumf>, %298, %cst_91 [1] : vector<8x128xf32> to vector<8xf32>
      %300 = vector.shape_cast %299 : vector<8xf32> to vector<8x1xf32>
      %301 = vector.broadcast %300 : vector<8x1xf32> to vector<8x128xf32>
      %302 = arith.subf %298, %301 : vector<8x128xf32>
      %303 = math.exp %302 : vector<8x128xf32>
      %cst_92 = arith.constant dense<0.000000e+00> : vector<8xf32>
      %304 = vector.multi_reduction <add>, %303, %cst_92 [1] : vector<8x128xf32> to vector<8xf32>
      %305 = vector.shape_cast %304 : vector<8xf32> to vector<8x1xf32>
      %306 = math.log %305 : vector<8x1xf32>
      %307 = arith.addf %300, %306 : vector<8x1xf32>
      %c0_93 = arith.constant 0 : index
      %c0_94 = arith.constant 0 : index
      %308 = vector.load %arg7[%c0_93, %c0_94] : memref<8x1xf32, #tpu.memory_space<vmem>>, vector<8x1xf32>
      tpu.vector_store %arg7[%c0_93, %c0_94], %307 {strides = array<i32>} : memref<8x1xf32, #tpu.memory_space<vmem>>, vector<8x1xf32>,
    } else {
    }
    return
  }
  func.func @transform_0(%arg0: i32, %arg1: i32) -> (i32, i32) {
    %c0_i32 = arith.constant 0 : i32
    %c0_i32_0 = arith.constant 0 : i32
    return %arg0, %c0_i32 : i32, i32
  }
  func.func @transform_1(%arg0: i32, %arg1: i32) -> (i32, i32, i32) {
    %c0_i32 = arith.constant 0 : i32
    %c0_i32_0 = arith.constant 0 : i32
    return %arg1, %arg0, %c0_i32 : i32, i32, i32
  }
  func.func @transform_2(%arg0: i32, %arg1: i32) -> (i32, i32) {
    %c0_i32 = arith.constant 0 : i32
    %c0_i32_0 = arith.constant 0 : i32
    %c0_i32_1 = arith.constant 0 : i32
    return %c0_i32, %c0_i32_0 : i32, i32
  }
  func.func @transform_3(%arg0: i32, %arg1: i32) -> (i32, i32) {
    %c0_i32 = arith.constant 0 : i32
    %c0_i32_0 = arith.constant 0 : i32
    %c0_i32_1 = arith.constant 0 : i32
    return %c0_i32, %c0_i32_0 : i32, i32
  }
  func.func @transform_4(%arg0: i32, %arg1: i32) -> (i32, i32) {
    %c0_i32 = arith.constant 0 : i32
    %c0_i32_0 = arith.constant 0 : i32
    %c0_i32_1 = arith.constant 0 : i32
    return %c0_i32, %c0_i32_0 : i32, i32
  }
  func.func @transform_5(%arg0: i32, %arg1: i32) -> (i32, i32) {
    %c0_i32 = arith.constant 0 : i32
    %c0_i32_0 = arith.constant 0 : i32
    return %arg0, %c0_i32 : i32, i32
  }
}

</mosaic_0001>

<llo_original>
// kernel: tpu_custom_call.1
$region0: #{tpu_custom_call.1}
  #allocation0 [shape = 'u32[]', space=smem, size = 0x4, offset = 0x4, fixed_abs, tag = 'smem constant byte address 0x4 - core index']
  #allocation1 [shape = 'u32[144,128]{1,0:T(1,128)}', space=vmem, size = 0x12000, scoped, tag = 'internal scratch']
  #allocation2 [shape = 'f32[8,128]{1,0:T(8,128)}', space=vmem, size = 0x1000, scoped, tag = 'scratch operand']
  %s0 = inlined_call_operand.vmem [shape: s32[8,1], index: 0, kind: input, shape index: {}]
  %s1 = inlined_call_operand.hbm [shape: f32[8,8,128], index: 1, kind: input, shape index: {}]
  %s2 = inlined_call_operand.hbm [shape: f32[128,128], index: 2, kind: input, shape index: {}]
  %s3 = inlined_call_operand.vmem [shape: f32[1,128], index: 3, kind: input, shape index: {}]
  %s4 = inlined_call_operand.vmem [shape: f32[1,128], index: 4, kind: input, shape index: {}]
  %s5 = inlined_call_operand.vmem [shape: f32[8,1], index: 5, kind: output, shape index: {}]
  %s6 = sld [smem:[#allocation0]]
  $region46: #{tpu_custom_call.1} parent=0
    _
  %s8 = ssub.s32 1, %s6
  %s9 = scalar_select 0, %s8, %s6
  $region1: #{tpu_custom_call.1} parent=0
    #allocation3 [shape = 'u8[32768]{0}', space=vmem, size = 0x8000, scoped, tag = 'input window, operand 1, single buffered']
    #allocation4 [shape = 's32[1]{0}', space=sflag, size = 0x4, scoped, tag = 'scoped memory for tpu_custom_call.1']
    #allocation5 [shape = 'u8[65536]{0}', space=vmem, size = 0x10000, scoped, tag = 'input window, operand 2, single buffered']
    #allocation6 [shape = 's32[1]{0}', space=sflag, size = 0x4, scoped, tag = 'scoped memory for tpu_custom_call.1']
    %10 = vsyncpa [#allocation4], 0
    %11 = vsyncpa [#allocation6], 0
    // Predicated region
    $region2: #{tpu_custom_call.1} parent=1 // pred_check
      _
    $region3: #{tpu_custom_call.1} parent=1 // pred_check_branch
      %13 = sbr.rel (0) target = $region5
    $region4: #{tpu_custom_call.1} parent=1 // pred_region
      _
    $region5: #{tpu_custom_call.1} parent=1 // pred_fallthru
      _
    // Predicated region
    $region6: #{tpu_custom_call.1} parent=1 // pred_check
      _
    $region7: #{tpu_custom_call.1} parent=1 // pred_check_branch
      %15 = sbr.rel (0) target = $region9
    $region8: #{tpu_custom_call.1} parent=1 // pred_region
      %s17 = ssub.s32 1024, 1024
      %18 = vsyncadd [#allocation4], %s17
      %s19 = sshll.u32 [#allocation3], 4
      %s20 = int_to_ptr.vmem [resolvable:$true] %s19
      %25 = dma.hbm_to_vmem [thread:$0]  %s1, 1024, %s20, [#allocation4], 128, 128, 8
    $region9: #{tpu_custom_call.1} parent=1 // pred_fallthru
      _
    // Predicated region
    $region10: #{tpu_custom_call.1} parent=1 // pred_check
      _
    $region11: #{tpu_custom_call.1} parent=1 // pred_check_branch
      %27 = sbr.rel (0) target = $region13
    $region12: #{tpu_custom_call.1} parent=1 // pred_region
      %s29 = ssub.s32 2048, 2048
      %30 = vsyncadd [#allocation6], %s29
      %s31 = sshll.u32 [#allocation5], 4
      %s32 = int_to_ptr.vmem [resolvable:$true] %s31
      %37 = dma.hbm_to_vmem [thread:$0]  %s2, 2048, %s32, [#allocation6], 128, 128, 8
    $region13: #{tpu_custom_call.1} parent=1 // pred_fallthru
      _
    // Predicated region
    $region14: #{tpu_custom_call.1} parent=1 // pred_check
      _
    $region15: #{tpu_custom_call.1} parent=1 // pred_check_branch
      %39 = sbr.rel (0) target = $region17
    $region16: #{tpu_custom_call.1} parent=1 // pred_region
      _
    $region17: #{tpu_custom_call.1} parent=1 // pred_fallthru
      _
    // Predicated region
    $region18: #{tpu_custom_call.1} parent=1 // pred_check
      _
    $region19: #{tpu_custom_call.1} parent=1 // pred_check_branch
      %41 = sbr.rel (0) target = $region21
    $region20: #{tpu_custom_call.1} parent=1 // pred_region
      _
    $region21: #{tpu_custom_call.1} parent=1 // pred_fallthru
      _
    // Predicated region
    $region22: #{tpu_custom_call.1} parent=1 // pred_check
      _
    $region23: #{tpu_custom_call.1} parent=1 // pred_check_branch
      %43 = sbr.rel (0) target = $region25
    $region24: #{tpu_custom_call.1} parent=1 // pred_region
      %44 = dma.done [#allocation4], 1024
    $region25: #{tpu_custom_call.1} parent=1 // pred_fallthru
      _
    // Predicated region
    $region26: #{tpu_custom_call.1} parent=1 // pred_check
      _
    $region27: #{tpu_custom_call.1} parent=1 // pred_check_branch
      %46 = sbr.rel (0) target = $region29
    $region28: #{tpu_custom_call.1} parent=1 // pred_region
      %47 = dma.done [#allocation6], 2048
    $region29: #{tpu_custom_call.1} parent=1 // pred_fallthru
      _
    %v48 = vld [vmem:[#allocation5] sm:$0xff]
    %v49 = vld [vmem:[#allocation5 + $0x8] sm:$0xff]
    %v50 = vld [vmem:[#allocation5 + $0x10] sm:$0xff]
    %v51 = vld [vmem:[#allocation5 + $0x18] sm:$0xff]
    %v52 = vld [vmem:[#allocation5 + $0x20] sm:$0xff]
    %v53 = vld [vmem:[#allocation5 + $0x28] sm:$0xff]
    %v54 = vld [vmem:[#allocation5 + $0x30] sm:$0xff]
    %v55 = vld [vmem:[#allocation5 + $0x38] sm:$0xff]
    %v56 = vld [vmem:[#allocation5 + $0x40] sm:$0xff]
    %v57 = vld [vmem:[#allocation5 + $0x48] sm:$0xff]
    %v58 = vld [vmem:[#allocation5 + $0x50] sm:$0xff]
    %v59 = vld [vmem:[#allocation5 + $0x58] sm:$0xff]
    %v60 = vld [vmem:[#allocation5 + $0x60] sm:$0xff]
    %v61 = vld [vmem:[#allocation5 + $0x68] sm:$0xff]
    %v62 = vld [vmem:[#allocation5 + $0x70] sm:$0xff]
    %v63 = vld [vmem:[#allocation5 + $0x78] sm:$0xff]
    %v64 = vld [vmem:[%s3] sm:$0x1]
    %v65 = vld [vmem:[%s4] sm:$0x1]
    %v66 = vld [vmem:[%s0] sm:$0xff]
    %v67 = vlaneseq
    %v68 = vand.u32 %v67, 127
    %vm69 = vcmp.lt.s32.totalorder %v68, 8
    %p70 = scmp.eq.s32.totalorder 0, 0
    // Predicated region
    $region30: #{tpu_custom_call.1} parent=1 // pred_check
      %p71 = pneg %p70
    $region31: #{tpu_custom_call.1} parent=1 // pred_check_branch
      %73 = sbr.rel (%p71) target = $region33
    $region32: #{tpu_custom_call.1} parent=1 // pred_region
      %v74 = vld [vmem:[#allocation3] sm:$0xff]
      %v76 = vlaneseq
      %v77 = vshrl.u32 %v76, 7
      %v78 = vsub.s32 0, %v77
      %v79 = vrot.slane %v64, %v78
      %v81 = vadd.f32 %v79, %v74
      %82 = vst [vmem:[#allocation2] sm:$0xff] %v81
    $region33: #{tpu_custom_call.1} parent=1 // pred_fallthru
      _
    %s83 = smul.u32 0, 8
    %v84 = vld [vmem:[#allocation2] sm:$0xff]
    %v85 = vld [vmem:[#allocation3] sm:$0xff]
    %86 = vmax.xlane.f32.xlu0 %v84
    %v87 = vpop.xlane.xlu0 %86
    %v88 = vsub.f32 %v84, %v87
    %v89 = vmul.f32 %v88, 1.442695
    %v90 = vpow.pop %v89
    %91 = vmatprep.subr.mxu0 0.0
    %92 = vmatpush1.msra.mxu0 %v48
    %93 = vmatprep.subr.mxu0 0.0
    %94 = vmatpush1.msra.mxu0 %v49
    %95 = vmatprep.subr.mxu0 0.0
    %96 = vmatpush1.msra.mxu0 %v50
    %97 = vmatprep.subr.mxu0 0.0
    %98 = vmatpush1.msra.mxu0 %v51
    %99 = vmatprep.subr.mxu0 0.0
    %100 = vmatpush1.msra.mxu0 %v52
    %101 = vmatprep.subr.mxu0 0.0
    %102 = vmatpush1.msra.mxu0 %v53
    %103 = vmatprep.subr.mxu0 0.0
    %104 = vmatpush1.msra.mxu0 %v54
    %105 = vmatprep.subr.mxu0 0.0
    %106 = vmatpush1.msra.mxu0 %v55
    %107 = vmatprep.subr.mxu0 0.0
    %108 = vmatpush1.msra.mxu0 %v56
    %109 = vmatprep.subr.mxu0 0.0
    %110 = vmatpush1.msra.mxu0 %v57
    %111 = vmatprep.subr.mxu0 0.0
    %112 = vmatpush1.msra.mxu0 %v58
    %113 = vmatprep.subr.mxu0 0.0
    %114 = vmatpush1.msra.mxu0 %v59
    %115 = vmatprep.subr.mxu0 0.0
    %116 = vmatpush1.msra.mxu0 %v60
    %117 = vmatprep.subr.mxu0 0.0
    %118 = vmatpush1.msra.mxu0 %v61
    %119 = vmatprep.subr.mxu0 0.0
    %120 = vmatpush1.msra.mxu0 %v62
    %121 = vmatprep.subr.mxu0 0.0
    %122 = vmatpush1.msra.mxu0 %v63
    %123 = vmatprep.subr.mxu0 0.0
    %124 = vmatpush1.msra.mxu0 0.0
    %125 = vmatprep.subr.mxu0 0.0
    %126 = vmatpush1.msra.mxu0 0.0
    %127 = vmatprep.subr.mxu0 0.0
    %128 = vmatpush1.msra.mxu0 0.0
    %129 = vmatprep.subr.mxu0 0.0
    %130 = vmatpush1.msra.mxu0 0.0
    %131 = vmatprep.subr.mxu0 0.0
    %132 = vmatpush1.msra.mxu0 0.0
    %133 = vmatprep.subr.mxu0 0.0
    %134 = vmatpush1.msra.mxu0 0.0
    %135 = vmatprep.subr.mxu0 0.0
    %136 = vmatpush1.msra.mxu0 0.0
    %137 = vmatprep.subr.mxu0 0.0
    %138 = vmatpush1.msra.mxu0 0.0
    %139 = vmatprep.subr.mxu0 0.0
    %140 = vmatpush1.msra.mxu0 0.0
    %141 = vmatprep.subr.mxu0 0.0
    %142 = vmatpush1.msra.mxu0 0.0
    %143 = vmatprep.subr.mxu0 0.0
    %144 = vmatpush1.msra.mxu0 0.0
    %145 = vmatprep.subr.mxu0 0.0
    %146 = vmatpush1.msra.mxu0 0.0
    %147 = vmatprep.subr.mxu0 0.0
    %148 = vmatpush1.msra.mxu0 0.0
    %149 = vmatprep.subr.mxu0 0.0
    %150 = vmatpush1.msra.mxu0 0.0
    %151 = vmatprep.subr.mxu0 0.0
    %152 = vmatpush1.msra.mxu0 0.0
    %153 = vmatprep.subr.mxu0 0.0
    %154 = vmatpush1.msra.mxu0 0.0
    %155 = vmatprep.mubr.f32.mxu0 0.0
    %156 = vmatmul.mubr.f32.gmra.mrb[0].mxu0 %v90
    %v157 = vpop.f32.mrb[0].mxu0
    %v158 = vadd.f32 0.0, %v157
    %v159 = vpop.f32.mrb[0].mxu0
    %160 = vdwg.mxu0
    %v161 = vadd.f32 %v85, %v87
    %v162 = vmax.f32 %v158, 1e-37
    %v163 = vlog2.pop %v162
    %v164 = vmul.f32 %v163, 0.6931472
    %v165 = vadd.f32 %v161, %v164
    %v166 = vsel %vm69, 1, 0
    %vm167 = vcmp.eq.s32.totalorder %v166, 1
    %v168 = vsel %vm167, %v165, -1e+30
    %p169 = scmp.ge.s32.totalorder %s83, 1
    %v170 = vstv %s83
    %vm171 = vcmp.lt.s32.totalorder %v170, %v66
    %s172 = scalar_select %p169, 1, 0
    %v173 = vstv %s172
    %vm174 = vcmp.eq.s32.totalorder %v173, 1
    %vm175 = vmand %vm174, %vm171
    %v176 = vsel %vm175, 1.0, 0.0
    %178 = vset.pattern.permute.xlu0 0
    %179 = vperm.xlu0 %178, %v176
    %v180 = vpop.permute.xlu0 %179
    %v182 = vmul.f32 %v168, %v180
    %v183 = vsub.f32 1.0, %v176
    %185 = vset.pattern.permute.xlu0 0
    %186 = vperm.xlu0 %185, %v183
    %v187 = vpop.permute.xlu0 %186
    %v189 = vmul.f32 %v84, %v187
    %v190 = vadd.f32 %v182, %v189
    %s191 = scalar_lea.vmem [#allocation3], 8
    %v192 = vld [vmem:[%s191] sm:$0xff]
    %193 = vmax.xlane.f32.xlu0 %v190
    %v194 = vpop.xlane.xlu0 %193
    %v195 = vsub.f32 %v190, %v194
    %v196 = vmul.f32 %v195, 1.442695
    %v197 = vpow.pop %v196
    %198 = vmatprep.subr.mxu0 0.0
    %199 = vmatpush1.msra.mxu0 %v48
    %200 = vmatprep.subr.mxu0 0.0
    %201 = vmatpush1.msra.mxu0 %v49
    %202 = vmatprep.subr.mxu0 0.0
    %203 = vmatpush1.msra.mxu0 %v50
    %204 = vmatprep.subr.mxu0 0.0
    %205 = vmatpush1.msra.mxu0 %v51
    %206 = vmatprep.subr.mxu0 0.0
    %207 = vmatpush1.msra.mxu0 %v52
    %208 = vmatprep.subr.mxu0 0.0
    %209 = vmatpush1.msra.mxu0 %v53
    %210 = vmatprep.subr.mxu0 0.0
    %211 = vmatpush1.msra.mxu0 %v54
    %212 = vmatprep.subr.mxu0 0.0
    %213 = vmatpush1.msra.mxu0 %v55
    %214 = vmatprep.subr.mxu0 0.0
    %215 = vmatpush1.msra.mxu0 %v56
    %216 = vmatprep.subr.mxu0 0.0
    %217 = vmatpush1.msra.mxu0 %v57
    %218 = vmatprep.subr.mxu0 0.0
    %219 = vmatpush1.msra.mxu0 %v58
    %220 = vmatprep.subr.mxu0 0.0
    %221 = vmatpush1.msra.mxu0 %v59
    %222 = vmatprep.subr.mxu0 0.0
    %223 = vmatpush1.msra.mxu0 %v60
    %224 = vmatprep.subr.mxu0 0.0
    %225 = vmatpush1.msra.mxu0 %v61
    %226 = vmatprep.subr.mxu0 0.0
    %227 = vmatpush1.msra.mxu0 %v62
    %228 = vmatprep.subr.mxu0 0.0
    %229 = vmatpush1.msra.mxu0 %v63
    %230 = vmatprep.subr.mxu0 0.0
    %231 = vmatpush1.msra.mxu0 0.0
    %232 = vmatprep.subr.mxu0 0.0
    %233 = vmatpush1.msra.mxu0 0.0
    %234 = vmatprep.subr.mxu0 0.0
    %235 = vmatpush1.msra.mxu0 0.0
    %236 = vmatprep.subr.mxu0 0.0
    %237 = vmatpush1.msra.mxu0 0.0
    %238 = vmatprep.subr.mxu0 0.0
    %239 = vmatpush1.msra.mxu0 0.0
    %240 = vmatprep.subr.mxu0 0.0
    %241 = vmatpush1.msra.mxu0 0.0
    %242 = vmatprep.subr.mxu0 0.0
    %243 = vmatpush1.msra.mxu0 0.0
    %244 = vmatprep.subr.mxu0 0.0
    %245 = vmatpush1.msra.mxu0 0.0
    %246 = vmatprep.subr.mxu0 0.0
    %247 = vmatpush1.msra.mxu0 0.0
    %248 = vmatprep.subr.mxu0 0.0
    %249 = vmatpush1.msra.mxu0 0.0
    %250 = vmatprep.subr.mxu0 0.0
    %251 = vmatpush1.msra.mxu0 0.0
    %252 = vmatprep.subr.mxu0 0.0
    %253 = vmatpush1.msra.mxu0 0.0
    %254 = vmatprep.subr.mxu0 0.0
    %255 = vmatpush1.msra.mxu0 0.0
    %256 = vmatprep.subr.mxu0 0.0
    %257 = vmatpush1.msra.mxu0 0.0
    %258 = vmatprep.subr.mxu0 0.0
    %259 = vmatpush1.msra.mxu0 0.0
    %260 = vmatprep.subr.mxu0 0.0
    %261 = vmatpush1.msra.mxu0 0.0
    %262 = vmatprep.mubr.f32.mxu0 0.0
    %263 = vmatmul.mubr.f32.gmra.mrb[0].mxu0 %v197
    %v264 = vpop.f32.mrb[0].mxu0
    %v265 = vadd.f32 0.0, %v264
    %v266 = vpop.f32.mrb[0].mxu0
    %267 = vdwg.mxu0
    %v268 = vadd.f32 %v192, %v194
    %v269 = vmax.f32 %v265, 1e-37
    %v270 = vlog2.pop %v269
    %v271 = vmul.f32 %v270, 0.6931472
    %v272 = vadd.f32 %v268, %v271
    %v273 = vsel %vm167, %v272, -1e+30
    %s274 = sadd.s32 %s83, 1
    %p275 = scmp.ge.s32.totalorder %s274, 1
    %v276 = vstv %s274
    %vm277 = vcmp.lt.s32.totalorder %v276, %v66
    %s278 = scalar_select %p275, 1, 0
    %v279 = vstv %s278
    %vm280 = vcmp.eq.s32.totalorder %v279, 1
    %vm281 = vmand %vm280, %vm277
    %v282 = vsel %vm281, 1.0, 0.0
    %284 = vset.pattern.permute.xlu0 0
    %285 = vperm.xlu0 %284, %v282
    %v286 = vpop.permute.xlu0 %285
    %v288 = vmul.f32 %v273, %v286
    %v289 = vsub.f32 1.0, %v282
    %291 = vset.pattern.permute.xlu0 0
    %292 = vperm.xlu0 %291, %v289
    %v293 = vpop.permute.xlu0 %292
    %v295 = vmul.f32 %v190, %v293
    %v296 = vadd.f32 %v288, %v295
    %s297 = scalar_lea.vmem [#allocation3], 16
    %v298 = vld [vmem:[%s297] sm:$0xff]
    %299 = vmax.xlane.f32.xlu0 %v296
    %v300 = vpop.xlane.xlu0 %299
    %v301 = vsub.f32 %v296, %v300
    %v302 = vmul.f32 %v301, 1.442695
    %v303 = vpow.pop %v302
    %304 = vmatprep.subr.mxu0 0.0
    %305 = vmatpush1.msra.mxu0 %v48
    %306 = vmatprep.subr.mxu0 0.0
    %307 = vmatpush1.msra.mxu0 %v49
    %308 = vmatprep.subr.mxu0 0.0
    %309 = vmatpush1.msra.mxu0 %v50
    %310 = vmatprep.subr.mxu0 0.0
    %311 = vmatpush1.msra.mxu0 %v51
    %312 = vmatprep.subr.mxu0 0.0
    %313 = vmatpush1.msra.mxu0 %v52
    %314 = vmatprep.subr.mxu0 0.0
    %315 = vmatpush1.msra.mxu0 %v53
    %316 = vmatprep.subr.mxu0 0.0
    %317 = vmatpush1.msra.mxu0 %v54
    %318 = vmatprep.subr.mxu0 0.0
    %319 = vmatpush1.msra.mxu0 %v55
    %320 = vmatprep.subr.mxu0 0.0
    %321 = vmatpush1.msra.mxu0 %v56
    %322 = vmatprep.subr.mxu0 0.0
    %323 = vmatpush1.msra.mxu0 %v57
    %324 = vmatprep.subr.mxu0 0.0
    %325 = vmatpush1.msra.mxu0 %v58
    %326 = vmatprep.subr.mxu0 0.0
    %327 = vmatpush1.msra.mxu0 %v59
    %328 = vmatprep.subr.mxu0 0.0
    %329 = vmatpush1.msra.mxu0 %v60
    %330 = vmatprep.subr.mxu0 0.0
    %331 = vmatpush1.msra.mxu0 %v61
    %332 = vmatprep.subr.mxu0 0.0
    %333 = vmatpush1.msra.mxu0 %v62
    %334 = vmatprep.subr.mxu0 0.0
    %335 = vmatpush1.msra.mxu0 %v63
    %336 = vmatprep.subr.mxu0 0.0
    %337 = vmatpush1.msra.mxu0 0.0
    %338 = vmatprep.subr.mxu0 0.0
    %339 = vmatpush1.msra.mxu0 0.0
    %340 = vmatprep.subr.mxu0 0.0
    %341 = vmatpush1.msra.mxu0 0.0
    %342 = vmatprep.subr.mxu0 0.0
    %343 = vmatpush1.msra.mxu0 0.0
    %344 = vmatprep.subr.mxu0 0.0
    %345 = vmatpush1.msra.mxu0 0.0
    %346 = vmatprep.subr.mxu0 0.0
    %347 = vmatpush1.msra.mxu0 0.0
    %348 = vmatprep.subr.mxu0 0.0
    %349 = vmatpush1.msra.mxu0 0.0
    %350 = vmatprep.subr.mxu0 0.0
    %351 = vmatpush1.msra.mxu0 0.0
    %352 = vmatprep.subr.mxu0 0.0
    %353 = vmatpush1.msra.mxu0 0.0
    %354 = vmatprep.subr.mxu0 0.0
    %355 = vmatpush1.msra.mxu0 0.0
    %356 = vmatprep.subr.mxu0 0.0
    %357 = vmatpush1.msra.mxu0 0.0
    %358 = vmatprep.subr.mxu0 0.0
    %359 = vmatpush1.msra.mxu0 0.0
    %360 = vmatprep.subr.mxu0 0.0
    %361 = vmatpush1.msra.mxu0 0.0
    %362 = vmatprep.subr.mxu0 0.0
    %363 = vmatpush1.msra.mxu0 0.0
    %364 = vmatprep.subr.mxu0 0.0
    %365 = vmatpush1.msra.mxu0 0.0
    %366 = vmatprep.subr.mxu0 0.0
    %367 = vmatpush1.msra.mxu0 0.0
    %368 = vmatprep.mubr.f32.mxu0 0.0
    %369 = vmatmul.mubr.f32.gmra.mrb[0].mxu0 %v303
    %v370 = vpop.f32.mrb[0].mxu0
    %v371 = vadd.f32 0.0, %v370
    %v372 = vpop.f32.mrb[0].mxu0
    %373 = vdwg.mxu0
    %v374 = vadd.f32 %v298, %v300
    %v375 = vmax.f32 %v371, 1e-37
    %v376 = vlog2.pop %v375
    %v377 = vmul.f32 %v376, 0.6931472
    %v378 = vadd.f32 %v374, %v377
    %v379 = vsel %vm167, %v378, -1e+30
    %s380 = sadd.s32 %s83, 2
    %p381 = scmp.ge.s32.totalorder %s380, 1
    %v382 = vstv %s380
    %vm383 = vcmp.lt.s32.totalorder %v382, %v66
    %s384 = scalar_select %p381, 1, 0
    %v385 = vstv %s384
    %vm386 = vcmp.eq.s32.totalorder %v385, 1
    %vm387 = vmand %vm386, %vm383
    %v388 = vsel %vm387, 1.0, 0.0
    %390 = vset.pattern.permute.xlu0 0
    %391 = vperm.xlu0 %390, %v388
    %v392 = vpop.permute.xlu0 %391
    %v394 = vmul.f32 %v379, %v392
    %v395 = vsub.f32 1.0, %v388
    %397 = vset.pattern.permute.xlu0 0
    %398 = vperm.xlu0 %397, %v395
    %v399 = vpop.permute.xlu0 %398
    %v401 = vmul.f32 %v296, %v399
    %v402 = vadd.f32 %v394, %v401
    %s403 = scalar_lea.vmem [#allocation3], 24
    %v404 = vld [vmem:[%s403] sm:$0xff]
    %405 = vmax.xlane.f32.xlu0 %v402
    %v406 = vpop.xlane.xlu0 %405
    %v407 = vsub.f32 %v402, %v406
    %v408 = vmul.f32 %v407, 1.442695
    %v409 = vpow.pop %v408
    %410 = vmatprep.subr.mxu0 0.0
    %411 = vmatpush1.msra.mxu0 %v48
    %412 = vmatprep.subr.mxu0 0.0
    %413 = vmatpush1.msra.mxu0 %v49
    %414 = vmatprep.subr.mxu0 0.0
    %415 = vmatpush1.msra.mxu0 %v50
    %416 = vmatprep.subr.mxu0 0.0
    %417 = vmatpush1.msra.mxu0 %v51
    %418 = vmatprep.subr.mxu0 0.0
    %419 = vmatpush1.msra.mxu0 %v52
    %420 = vmatprep.subr.mxu0 0.0
    %421 = vmatpush1.msra.mxu0 %v53
    %422 = vmatprep.subr.mxu0 0.0
    %423 = vmatpush1.msra.mxu0 %v54
    %424 = vmatprep.subr.mxu0 0.0
    %425 = vmatpush1.msra.mxu0 %v55
    %426 = vmatprep.subr.mxu0 0.0
    %427 = vmatpush1.msra.mxu0 %v56
    %428 = vmatprep.subr.mxu0 0.0
    %429 = vmatpush1.msra.mxu0 %v57
    %430 = vmatprep.subr.mxu0 0.0
    %431 = vmatpush1.msra.mxu0 %v58
    %432 = vmatprep.subr.mxu0 0.0
    %433 = vmatpush1.msra.mxu0 %v59
    %434 = vmatprep.subr.mxu0 0.0
    %435 = vmatpush1.msra.mxu0 %v60
    %436 = vmatprep.subr.mxu0 0.0
    %437 = vmatpush1.msra.mxu0 %v61
    %438 = vmatprep.subr.mxu0 0.0
    %439 = vmatpush1.msra.mxu0 %v62
    %440 = vmatprep.subr.mxu0 0.0
    %441 = vmatpush1.msra.mxu0 %v63
    %442 = vmatprep.subr.mxu0 0.0
    %443 = vmatpush1.msra.mxu0 0.0
    %444 = vmatprep.subr.mxu0 0.0
    %445 = vmatpush1.msra.mxu0 0.0
    %446 = vmatprep.subr.mxu0 0.0
    %447 = vmatpush1.msra.mxu0 0.0
    %448 = vmatprep.subr.mxu0 0.0
    %449 = vmatpush1.msra.mxu0 0.0
    %450 = vmatprep.subr.mxu0 0.0
    %451 = vmatpush1.msra.mxu0 0.0
    %452 = vmatprep.subr.mxu0 0.0
    %453 = vmatpush1.msra.mxu0 0.0
    %454 = vmatprep.subr.mxu0 0.0
    %455 = vmatpush1.msra.mxu0 0.0
    %456 = vmatprep.subr.mxu0 0.0
    %457 = vmatpush1.msra.mxu0 0.0
    %458 = vmatprep.subr.mxu0 0.0
    %459 = vmatpush1.msra.mxu0 0.0
    %460 = vmatprep.subr.mxu0 0.0
    %461 = vmatpush1.msra.mxu0 0.0
    %462 = vmatprep.subr.mxu0 0.0
    %463 = vmatpush1.msra.mxu0 0.0
    %464 = vmatprep.subr.mxu0 0.0
    %465 = vmatpush1.msra.mxu0 0.0
    %466 = vmatprep.subr.mxu0 0.0
    %467 = vmatpush1.msra.mxu0 0.0
    %468 = vmatprep.subr.mxu0 0.0
    %469 = vmatpush1.msra.mxu0 0.0
    %470 = vmatprep.subr.mxu0 0.0
    %471 = vmatpush1.msra.mxu0 0.0
    %472 = vmatprep.subr.mxu0 0.0
    %473 = vmatpush1.msra.mxu0 0.0
    %474 = vmatprep.mubr.f32.mxu0 0.0
    %475 = vmatmul.mubr.f32.gmra.mrb[0].mxu0 %v409
    %v476 = vpop.f32.mrb[0].mxu0
    %v477 = vadd.f32 0.0, %v476
    %v478 = vpop.f32.mrb[0].mxu0
    %479 = vdwg.mxu0
    %v480 = vadd.f32 %v404, %v406
    %v481 = vmax.f32 %v477, 1e-37
    %v482 = vlog2.pop %v481
    %v483 = vmul.f32 %v482, 0.6931472
    %v484 = vadd.f32 %v480, %v483
    %v485 = vsel %vm167, %v484, -1e+30
    %s486 = sadd.s32 %s83, 3
    %p487 = scmp.ge.s32.totalorder %s486, 1
    %v488 = vstv %s486
    %vm489 = vcmp.lt.s32.totalorder %v488, %v66
    %s490 = scalar_select %p487, 1, 0
    %v491 = vstv %s490
    %vm492 = vcmp.eq.s32.totalorder %v491, 1
    %vm493 = vmand %vm492, %vm489
    %v494 = vsel %vm493, 1.0, 0.0
    %496 = vset.pattern.permute.xlu0 0
    %497 = vperm.xlu0 %496, %v494
    %v498 = vpop.permute.xlu0 %497
    %v500 = vmul.f32 %v485, %v498
    %v501 = vsub.f32 1.0, %v494
    %503 = vset.pattern.permute.xlu0 0
    %504 = vperm.xlu0 %503, %v501
    %v505 = vpop.permute.xlu0 %504
    %v507 = vmul.f32 %v402, %v505
    %v508 = vadd.f32 %v500, %v507
    %s509 = scalar_lea.vmem [#allocation3], 32
    %v510 = vld [vmem:[%s509] sm:$0xff]
    %511 = vmax.xlane.f32.xlu0 %v508
    %v512 = vpop.xlane.xlu0 %511
    %v513 = vsub.f32 %v508, %v512
    %v514 = vmul.f32 %v513, 1.442695
    %v515 = vpow.pop %v514
    %516 = vmatprep.subr.mxu0 0.0
    %517 = vmatpush1.msra.mxu0 %v48
    %518 = vmatprep.subr.mxu0 0.0
    %519 = vmatpush1.msra.mxu0 %v49
    %520 = vmatprep.subr.mxu0 0.0
    %521 = vmatpush1.msra.mxu0 %v50
    %522 = vmatprep.subr.mxu0 0.0
    %523 = vmatpush1.msra.mxu0 %v51
    %524 = vmatprep.subr.mxu0 0.0
    %525 = vmatpush1.msra.mxu0 %v52
    %526 = vmatprep.subr.mxu0 0.0
    %527 = vmatpush1.msra.mxu0 %v53
    %528 = vmatprep.subr.mxu0 0.0
    %529 = vmatpush1.msra.mxu0 %v54
    %530 = vmatprep.subr.mxu0 0.0
    %531 = vmatpush1.msra.mxu0 %v55
    %532 = vmatprep.subr.mxu0 0.0
    %533 = vmatpush1.msra.mxu0 %v56
    %534 = vmatprep.subr.mxu0 0.0
    %535 = vmatpush1.msra.mxu0 %v57
    %536 = vmatprep.subr.mxu0 0.0
    %537 = vmatpush1.msra.mxu0 %v58
    %538 = vmatprep.subr.mxu0 0.0
    %539 = vmatpush1.msra.mxu0 %v59
    %540 = vmatprep.subr.mxu0 0.0
    %541 = vmatpush1.msra.mxu0 %v60
    %542 = vmatprep.subr.mxu0 0.0
    %543 = vmatpush1.msra.mxu0 %v61
    %544 = vmatprep.subr.mxu0 0.0
    %545 = vmatpush1.msra.mxu0 %v62
    %546 = vmatprep.subr.mxu0 0.0
    %547 = vmatpush1.msra.mxu0 %v63
    %548 = vmatprep.subr.mxu0 0.0
    %549 = vmatpush1.msra.mxu0 0.0
    %550 = vmatprep.subr.mxu0 0.0
    %551 = vmatpush1.msra.mxu0 0.0
    %552 = vmatprep.subr.mxu0 0.0
    %553 = vmatpush1.msra.mxu0 0.0
    %554 = vmatprep.subr.mxu0 0.0
    %555 = vmatpush1.msra.mxu0 0.0
    %556 = vmatprep.subr.mxu0 0.0
    %557 = vmatpush1.msra.mxu0 0.0
    %558 = vmatprep.subr.mxu0 0.0
    %559 = vmatpush1.msra.mxu0 0.0
    %560 = vmatprep.subr.mxu0 0.0
    %561 = vmatpush1.msra.mxu0 0.0
    %562 = vmatprep.subr.mxu0 0.0
    %563 = vmatpush1.msra.mxu0 0.0
    %564 = vmatprep.subr.mxu0 0.0
    %565 = vmatpush1.msra.mxu0 0.0
    %566 = vmatprep.subr.mxu0 0.0
    %567 = vmatpush1.msra.mxu0 0.0
    %568 = vmatprep.subr.mxu0 0.0
    %569 = vmatpush1.msra.mxu0 0.0
    %570 = vmatprep.subr.mxu0 0.0
    %571 = vmatpush1.msra.mxu0 0.0
    %572 = vmatprep.subr.mxu0 0.0
    %573 = vmatpush1.msra.mxu0 0.0
    %574 = vmatprep.subr.mxu0 0.0
    %575 = vmatpush1.msra.mxu0 0.0
    %576 = vmatprep.subr.mxu0 0.0
    %577 = vmatpush1.msra.mxu0 0.0
    %578 = vmatprep.subr.mxu0 0.0
    %579 = vmatpush1.msra.mxu0 0.0
    %580 = vmatprep.mubr.f32.mxu0 0.0
    %581 = vmatmul.mubr.f32.gmra.mrb[0].mxu0 %v515
    %v582 = vpop.f32.mrb[0].mxu0
    %v583 = vadd.f32 0.0, %v582
    %v584 = vpop.f32.mrb[0].mxu0
    %585 = vdwg.mxu0
    %v586 = vadd.f32 %v510, %v512
    %v587 = vmax.f32 %v583, 1e-37
    %v588 = vlog2.pop %v587
    %v589 = vmul.f32 %v588, 0.6931472
    %v590 = vadd.f32 %v586, %v589
    %v591 = vsel %vm167, %v590, -1e+30
    %s592 = sadd.s32 %s83, 4
    %p593 = scmp.ge.s32.totalorder %s592, 1
    %v594 = vstv %s592
    %vm595 = vcmp.lt.s32.totalorder %v594, %v66
    %s596 = scalar_select %p593, 1, 0
    %v597 = vstv %s596
    %vm598 = vcmp.eq.s32.totalorder %v597, 1
    %vm599 = vmand %vm598, %vm595
    %v600 = vsel %vm599, 1.0, 0.0
    %602 = vset.pattern.permute.xlu0 0
    %603 = vperm.xlu0 %602, %v600
    %v604 = vpop.permute.xlu0 %603
    %v606 = vmul.f32 %v591, %v604
    %v607 = vsub.f32 1.0, %v600
    %609 = vset.pattern.permute.xlu0 0
    %610 = vperm.xlu0 %609, %v607
    %v611 = vpop.permute.xlu0 %610
    %v613 = vmul.f32 %v508, %v611
    %v614 = vadd.f32 %v606, %v613
    %s615 = scalar_lea.vmem [#allocation3], 40
    %v616 = vld [vmem:[%s615] sm:$0xff]
    %617 = vmax.xlane.f32.xlu0 %v614
    %v618 = vpop.xlane.xlu0 %617
    %v619 = vsub.f32 %v614, %v618
    %v620 = vmul.f32 %v619, 1.442695
    %v621 = vpow.pop %v620
    %622 = vmatprep.subr.mxu0 0.0
    %623 = vmatpush1.msra.mxu0 %v48
    %624 = vmatprep.subr.mxu0 0.0
    %625 = vmatpush1.msra.mxu0 %v49
    %626 = vmatprep.subr.mxu0 0.0
    %627 = vmatpush1.msra.mxu0 %v50
    %628 = vmatprep.subr.mxu0 0.0
    %629 = vmatpush1.msra.mxu0 %v51
    %630 = vmatprep.subr.mxu0 0.0
    %631 = vmatpush1.msra.mxu0 %v52
    %632 = vmatprep.subr.mxu0 0.0
    %633 = vmatpush1.msra.mxu0 %v53
    %634 = vmatprep.subr.mxu0 0.0
    %635 = vmatpush1.msra.mxu0 %v54
    %636 = vmatprep.subr.mxu0 0.0
    %637 = vmatpush1.msra.mxu0 %v55
    %638 = vmatprep.subr.mxu0 0.0
    %639 = vmatpush1.msra.mxu0 %v56
    %640 = vmatprep.subr.mxu0 0.0
    %641 = vmatpush1.msra.mxu0 %v57
    %642 = vmatprep.subr.mxu0 0.0
    %643 = vmatpush1.msra.mxu0 %v58
    %644 = vmatprep.subr.mxu0 0.0
    %645 = vmatpush1.msra.mxu0 %v59
    %646 = vmatprep.subr.mxu0 0.0
    %647 = vmatpush1.msra.mxu0 %v60
    %648 = vmatprep.subr.mxu0 0.0
    %649 = vmatpush1.msra.mxu0 %v61
    %650 = vmatprep.subr.mxu0 0.0
    %651 = vmatpush1.msra.mxu0 %v62
    %652 = vmatprep.subr.mxu0 0.0
    %653 = vmatpush1.msra.mxu0 %v63
    %654 = vmatprep.subr.mxu0 0.0
    %655 = vmatpush1.msra.mxu0 0.0
    %656 = vmatprep.subr.mxu0 0.0
    %657 = vmatpush1.msra.mxu0 0.0
    %658 = vmatprep.subr.mxu0 0.0
    %659 = vmatpush1.msra.mxu0 0.0
    %660 = vmatprep.subr.mxu0 0.0
    %661 = vmatpush1.msra.mxu0 0.0
    %662 = vmatprep.subr.mxu0 0.0
    %663 = vmatpush1.msra.mxu0 0.0
    %664 = vmatprep.subr.mxu0 0.0
    %665 = vmatpush1.msra.mxu0 0.0
    %666 = vmatprep.subr.mxu0 0.0
    %667 = vmatpush1.msra.mxu0 0.0
    %668 = vmatprep.subr.mxu0 0.0
    %669 = vmatpush1.msra.mxu0 0.0
    %670 = vmatprep.subr.mxu0 0.0
    %671 = vmatpush1.msra.mxu0 0.0
    %672 = vmatprep.subr.mxu0 0.0
    %673 = vmatpush1.msra.mxu0 0.0
    %674 = vmatprep.subr.mxu0 0.0
    %675 = vmatpush1.msra.mxu0 0.0
    %676 = vmatprep.subr.mxu0 0.0
    %677 = vmatpush1.msra.mxu0 0.0
    %678 = vmatprep.subr.mxu0 0.0
    %679 = vmatpush1.msra.mxu0 0.0
    %680 = vmatprep.subr.mxu0 0.0
    %681 = vmatpush1.msra.mxu0 0.0
    %682 = vmatprep.subr.mxu0 0.0
    %683 = vmatpush1.msra.mxu0 0.0
    %684 = vmatprep.subr.mxu0 0.0
    %685 = vmatpush1.msra.mxu0 0.0
    %686 = vmatprep.mubr.f32.mxu0 0.0
    %687 = vmatmul.mubr.f32.gmra.mrb[0].mxu0 %v621
    %v688 = vpop.f32.mrb[0].mxu0
    %v689 = vadd.f32 0.0, %v688
    %v690 = vpop.f32.mrb[0].mxu0
    %691 = vdwg.mxu0
    %v692 = vadd.f32 %v616, %v618
    %v693 = vmax.f32 %v689, 1e-37
    %v694 = vlog2.pop %v693
    %v695 = vmul.f32 %v694, 0.6931472
    %v696 = vadd.f32 %v692, %v695
    %v697 = vsel %vm167, %v696, -1e+30
    %s698 = sadd.s32 %s83, 5
    %p699 = scmp.ge.s32.totalorder %s698, 1
    %v700 = vstv %s698
    %vm701 = vcmp.lt.s32.totalorder %v700, %v66
    %s702 = scalar_select %p699, 1, 0
    %v703 = vstv %s702
    %vm704 = vcmp.eq.s32.totalorder %v703, 1
    %vm705 = vmand %vm704, %vm701
    %v706 = vsel %vm705, 1.0, 0.0
    %708 = vset.pattern.permute.xlu0 0
    %709 = vperm.xlu0 %708, %v706
    %v710 = vpop.permute.xlu0 %709
    %v712 = vmul.f32 %v697, %v710
    %v713 = vsub.f32 1.0, %v706
    %715 = vset.pattern.permute.xlu0 0
    %716 = vperm.xlu0 %715, %v713
    %v717 = vpop.permute.xlu0 %716
    %v719 = vmul.f32 %v614, %v717
    %v720 = vadd.f32 %v712, %v719
    %s721 = scalar_lea.vmem [#allocation3], 48
    %v722 = vld [vmem:[%s721] sm:$0xff]
    %723 = vmax.xlane.f32.xlu0 %v720
    %v724 = vpop.xlane.xlu0 %723
    %v725 = vsub.f32 %v720, %v724
    %v726 = vmul.f32 %v725, 1.442695
    %v727 = vpow.pop %v726
    %728 = vmatprep.subr.mxu0 0.0
    %729 = vmatpush1.msra.mxu0 %v48
    %730 = vmatprep.subr.mxu0 0.0
    %731 = vmatpush1.msra.mxu0 %v49
    %732 = vmatprep.subr.mxu0 0.0
    %733 = vmatpush1.msra.mxu0 %v50
    %734 = vmatprep.subr.mxu0 0.0
    %735 = vmatpush1.msra.mxu0 %v51
    %736 = vmatprep.subr.mxu0 0.0
    %737 = vmatpush1.msra.mxu0 %v52
    %738 = vmatprep.subr.mxu0 0.0
    %739 = vmatpush1.msra.mxu0 %v53
    %740 = vmatprep.subr.mxu0 0.0
    %741 = vmatpush1.msra.mxu0 %v54
    %742 = vmatprep.subr.mxu0 0.0
    %743 = vmatpush1.msra.mxu0 %v55
    %744 = vmatprep.subr.mxu0 0.0
    %745 = vmatpush1.msra.mxu0 %v56
    %746 = vmatprep.subr.mxu0 0.0
    %747 = vmatpush1.msra.mxu0 %v57
    %748 = vmatprep.subr.mxu0 0.0
    %749 = vmatpush1.msra.mxu0 %v58
    %750 = vmatprep.subr.mxu0 0.0
    %751 = vmatpush1.msra.mxu0 %v59
    %752 = vmatprep.subr.mxu0 0.0
    %753 = vmatpush1.msra.mxu0 %v60
    %754 = vmatprep.subr.mxu0 0.0
    %755 = vmatpush1.msra.mxu0 %v61
    %756 = vmatprep.subr.mxu0 0.0
    %757 = vmatpush1.msra.mxu0 %v62
    %758 = vmatprep.subr.mxu0 0.0
    %759 = vmatpush1.msra.mxu0 %v63
    %760 = vmatprep.subr.mxu0 0.0
    %761 = vmatpush1.msra.mxu0 0.0
    %762 = vmatprep.subr.mxu0 0.0
    %763 = vmatpush1.msra.mxu0 0.0
    %764 = vmatprep.subr.mxu0 0.0
    %765 = vmatpush1.msra.mxu0 0.0
    %766 = vmatprep.subr.mxu0 0.0
    %767 = vmatpush1.msra.mxu0 0.0
    %768 = vmatprep.subr.mxu0 0.0
    %769 = vmatpush1.msra.mxu0 0.0
    %770 = vmatprep.subr.mxu0 0.0
    %771 = vmatpush1.msra.mxu0 0.0
    %772 = vmatprep.subr.mxu0 0.0
    %773 = vmatpush1.msra.mxu0 0.0
    %774 = vmatprep.subr.mxu0 0.0
    %775 = vmatpush1.msra.mxu0 0.0
    %776 = vmatprep.subr.mxu0 0.0
    %777 = vmatpush1.msra.mxu0 0.0
    %778 = vmatprep.subr.mxu0 0.0
    %779 = vmatpush1.msra.mxu0 0.0
    %780 = vmatprep.subr.mxu0 0.0
    %781 = vmatpush1.msra.mxu0 0.0
    %782 = vmatprep.subr.mxu0 0.0
    %783 = vmatpush1.msra.mxu0 0.0
    %784 = vmatprep.subr.mxu0 0.0
    %785 = vmatpush1.msra.mxu0 0.0
    %786 = vmatprep.subr.mxu0 0.0
    %787 = vmatpush1.msra.mxu0 0.0
    %788 = vmatprep.subr.mxu0 0.0
    %789 = vmatpush1.msra.mxu0 0.0
    %790 = vmatprep.subr.mxu0 0.0
    %791 = vmatpush1.msra.mxu0 0.0
    %792 = vmatprep.mubr.f32.mxu0 0.0
    %793 = vmatmul.mubr.f32.gmra.mrb[0].mxu0 %v727
    %v794 = vpop.f32.mrb[0].mxu0
    %v795 = vadd.f32 0.0, %v794
    %v796 = vpop.f32.mrb[0].mxu0
    %797 = vdwg.mxu0
    %v798 = vadd.f32 %v722, %v724
    %v799 = vmax.f32 %v795, 1e-37
    %v800 = vlog2.pop %v799
    %v801 = vmul.f32 %v800, 0.6931472
    %v802 = vadd.f32 %v798, %v801
    %v803 = vsel %vm167, %v802, -1e+30
    %s804 = sadd.s32 %s83, 6
    %p805 = scmp.ge.s32.totalorder %s804, 1
    %v806 = vstv %s804
    %vm807 = vcmp.lt.s32.totalorder %v806, %v66
    %s808 = scalar_select %p805, 1, 0
    %v809 = vstv %s808
    %vm810 = vcmp.eq.s32.totalorder %v809, 1
    %vm811 = vmand %vm810, %vm807
    %v812 = vsel %vm811, 1.0, 0.0
    %814 = vset.pattern.permute.xlu0 0
    %815 = vperm.xlu0 %814, %v812
    %v816 = vpop.permute.xlu0 %815
    %v818 = vmul.f32 %v803, %v816
    %v819 = vsub.f32 1.0, %v812
    %821 = vset.pattern.permute.xlu0 0
    %822 = vperm.xlu0 %821, %v819
    %v823 = vpop.permute.xlu0 %822
    %v825 = vmul.f32 %v720, %v823
    %v826 = vadd.f32 %v818, %v825
    %s827 = scalar_lea.vmem [#allocation3], 56
    %v828 = vld [vmem:[%s827] sm:$0xff]
    %829 = vmax.xlane.f32.xlu0 %v826
    %v830 = vpop.xlane.xlu0 %829
    %v831 = vsub.f32 %v826, %v830
    %v832 = vmul.f32 %v831, 1.442695
    %v833 = vpow.pop %v832
    %834 = vmatprep.subr.mxu0 0.0
    %835 = vmatpush1.msra.mxu0 %v48
    %836 = vmatprep.subr.mxu0 0.0
    %837 = vmatpush1.msra.mxu0 %v49
    %838 = vmatprep.subr.mxu0 0.0
    %839 = vmatpush1.msra.mxu0 %v50
    %840 = vmatprep.subr.mxu0 0.0
    %841 = vmatpush1.msra.mxu0 %v51
    %842 = vmatprep.subr.mxu0 0.0
    %843 = vmatpush1.msra.mxu0 %v52
    %844 = vmatprep.subr.mxu0 0.0
    %845 = vmatpush1.msra.mxu0 %v53
    %846 = vmatprep.subr.mxu0 0.0
    %847 = vmatpush1.msra.mxu0 %v54
    %848 = vmatprep.subr.mxu0 0.0
    %849 = vmatpush1.msra.mxu0 %v55
    %850 = vmatprep.subr.mxu0 0.0
    %851 = vmatpush1.msra.mxu0 %v56
    %852 = vmatprep.subr.mxu0 0.0
    %853 = vmatpush1.msra.mxu0 %v57
    %854 = vmatprep.subr.mxu0 0.0
    %855 = vmatpush1.msra.mxu0 %v58
    %856 = vmatprep.subr.mxu0 0.0
    %857 = vmatpush1.msra.mxu0 %v59
    %858 = vmatprep.subr.mxu0 0.0
    %859 = vmatpush1.msra.mxu0 %v60
    %860 = vmatprep.subr.mxu0 0.0
    %861 = vmatpush1.msra.mxu0 %v61
    %862 = vmatprep.subr.mxu0 0.0
    %863 = vmatpush1.msra.mxu0 %v62
    %864 = vmatprep.subr.mxu0 0.0
    %865 = vmatpush1.msra.mxu0 %v63
    %866 = vmatprep.subr.mxu0 0.0
    %867 = vmatpush1.msra.mxu0 0.0
    %868 = vmatprep.subr.mxu0 0.0
    %869 = vmatpush1.msra.mxu0 0.0
    %870 = vmatprep.subr.mxu0 0.0
    %871 = vmatpush1.msra.mxu0 0.0
    %872 = vmatprep.subr.mxu0 0.0
    %873 = vmatpush1.msra.mxu0 0.0
    %874 = vmatprep.subr.mxu0 0.0
    %875 = vmatpush1.msra.mxu0 0.0
    %876 = vmatprep.subr.mxu0 0.0
    %877 = vmatpush1.msra.mxu0 0.0
    %878 = vmatprep.subr.mxu0 0.0
    %879 = vmatpush1.msra.mxu0 0.0
    %880 = vmatprep.subr.mxu0 0.0
    %881 = vmatpush1.msra.mxu0 0.0
    %882 = vmatprep.subr.mxu0 0.0
    %883 = vmatpush1.msra.mxu0 0.0
    %884 = vmatprep.subr.mxu0 0.0
    %885 = vmatpush1.msra.mxu0 0.0
    %886 = vmatprep.subr.mxu0 0.0
    %887 = vmatpush1.msra.mxu0 0.0
    %888 = vmatprep.subr.mxu0 0.0
    %889 = vmatpush1.msra.mxu0 0.0
    %890 = vmatprep.subr.mxu0 0.0
    %891 = vmatpush1.msra.mxu0 0.0
    %892 = vmatprep.subr.mxu0 0.0
    %893 = vmatpush1.msra.mxu0 0.0
    %894 = vmatprep.subr.mxu0 0.0
    %895 = vmatpush1.msra.mxu0 0.0
    %896 = vmatprep.subr.mxu0 0.0
    %897 = vmatpush1.msra.mxu0 0.0
    %898 = vmatprep.mubr.f32.mxu0 0.0
    %899 = vmatmul.mubr.f32.gmra.mrb[0].mxu0 %v833
    %v900 = vpop.f32.mrb[0].mxu0
    %v901 = vadd.f32 0.0, %v900
    %v902 = vpop.f32.mrb[0].mxu0
    %903 = vdwg.mxu0
    %v904 = vadd.f32 %v828, %v830
    %v905 = vmax.f32 %v901, 1e-37
    %v906 = vlog2.pop %v905
    %v907 = vmul.f32 %v906, 0.6931472
    %v908 = vadd.f32 %v904, %v907
    %v909 = vsel %vm167, %v908, -1e+30
    %s910 = sadd.s32 %s83, 7
    %p911 = scmp.ge.s32.totalorder %s910, 1
    %v912 = vstv %s910
    %vm913 = vcmp.lt.s32.totalorder %v912, %v66
    %s914 = scalar_select %p911, 1, 0
    %v915 = vstv %s914
    %vm916 = vcmp.eq.s32.totalorder %v915, 1
    %vm917 = vmand %vm916, %vm913
    %v918 = vsel %vm917, 1.0, 0.0
    %920 = vset.pattern.permute.xlu0 0
    %921 = vperm.xlu0 %920, %v918
    %v922 = vpop.permute.xlu0 %921
    %v924 = vmul.f32 %v909, %v922
    %v925 = vsub.f32 1.0, %v918
    %927 = vset.pattern.permute.xlu0 0
    %928 = vperm.xlu0 %927, %v925
    %v929 = vpop.permute.xlu0 %928
    %v931 = vmul.f32 %v826, %v929
    %v932 = vadd.f32 %v924, %v931
    %933 = vst [vmem:[#allocation2] sm:$0xff] %v932
    // Predicated region
    $region34: #{tpu_custom_call.1} parent=1 // pred_check
      %p934 = pneg %p70
    $region35: #{tpu_custom_call.1} parent=1 // pred_check_branch
      %936 = sbr.rel (%p934) target = $region37
    $region36: #{tpu_custom_call.1} parent=1 // pred_region
      %v937 = vld [vmem:[#allocation2] sm:$0xff]
      %v939 = vlaneseq
      %v940 = vshrl.u32 %v939, 7
      %v941 = vsub.s32 0, %v940
      %v942 = vrot.slane %v65, %v941
      %v944 = vadd.f32 %v937, %v942
      %945 = vmax.xlane.f32.xlu0 %v944
      %v946 = vpop.xlane.xlu0 %945
      %v947 = vsub.f32 %v944, %v946
      %v948 = vmul.f32 %v947, 1.442695
      %v949 = vpow.pop %v948
      %950 = vadd.xlane.f32.xlu0 %v949
      %v951 = vpop.xlane.xlu0 %950
      %v952 = vlog2.pop %v951
      %v953 = vmul.f32 %v952, 0.6931472
      %v954 = vadd.f32 %v946, %v953
      %vm955 = vcmask 7168
      %956 = vst.msk [vmem:[%s5] sm:$0xff] %vm955, %v954
    $region37: #{tpu_custom_call.1} parent=1 // pred_fallthru
      _
    // Predicated region
    $region38: #{tpu_custom_call.1} parent=1 // pred_check
      _
    $region39: #{tpu_custom_call.1} parent=1 // pred_check_branch
      %958 = sbr.rel (0) target = $region41
    $region40: #{tpu_custom_call.1} parent=1 // pred_region
      _
    $region41: #{tpu_custom_call.1} parent=1 // pred_fallthru
      _
    // Predicated region
    $region42: #{tpu_custom_call.1} parent=1 // pred_check
      _
    $region43: #{tpu_custom_call.1} parent=1 // pred_check_branch
      %960 = sbr.rel (0) target = $region45
    $region44: #{tpu_custom_call.1} parent=1 // pred_region
      _
    $region45: #{tpu_custom_call.1} parent=1 // pred_fallthru
      _
    %961 = vsyncpa [#allocation4], 1
    %962 = vsyncpa [#allocation6], 1

</llo_original>
